<compile_context>
chip_gen: v6e
topology: v6e:2x2x1
jax: 0.10.0
libtpu: 0.0.40
codegen_flags: <defaults>
</compile_context>

<pallas_src>
import functools

import jax
import jax.numpy as jnp
from jax import lax
from jax.experimental import pallas as pl
from jax.experimental.pallas import tpu as pltpu

K = 5              # kersize of the UniRepLKNet depthwise block
PAD = K // 2
EPS = 1e-5         # BatchNorm2d default eps


# ------------------------------ activations ------------------------------- #
def _mish_fast(x, *, approx=True):
    """Mish with a single exp.

    tanh(softplus(x)) = u / (u + 2),  u = e^x (e^x + 2).
    Clamp at 20 matches torch's softplus threshold (ratio is 1.0 in f32 above
    that).  For very negative x the exp underflows and the result is exactly 0
    (true Mish ~ x*e^x there, magnitude < 1e-30 — benign).
    approx=True routes the reciprocal to the EUP approximation (no Newton
    refinement); approx=False is the bit-accurate divide used for validation.
    """
    t = jnp.exp(jnp.minimum(x, 20.0))
    u = t * (t + 2.0)
    if approx:
        return x * (u * pl.reciprocal(u + 2.0, approx=True))
    return x * (u / (u + 2.0))


def _softplus_ref(x):
    # matches torch.nn.functional.softplus (threshold=20) -- reference only
    return jnp.where(x > 20.0, x, jnp.log1p(jnp.exp(jnp.minimum(x, 20.0))))


def _mish_ref(x):
    return x * jnp.tanh(_softplus_ref(x))


# ----------------------------- Pallas kernel ------------------------------ #
def depth_bottleneck_kernel(x_ref, w1_ref, b1_ref, dwk_ref, dwb_ref,
                            w3_ref, b3_ref, o_ref, *, H, W, Cmid, tile_h,
                            approx_mish):
    # x_ref  : (1, H+2P, (W+2P)*Cin)   zero-padded input, resident per batch
    # w1_ref : ((W+2P)*Cin, (W+2P)*Cmid)  block-diagonal 1x1 conv (+BN fused)
    # dwk_ref: (K*K, tile_h, W*Cmid)      merged 5x5 taps, pre-broadcast rows
    # w3_ref : (W*Cmid, W*Cout)           block-diagonal 1x1 conv (+BN fused)
    # o_ref  : (1, tile_h, W*Cout)        lane-dense output tile
    halo_rows = tile_h + 2 * PAD
    mid_l = W * Cmid
    mish = functools.partial(_mish_fast, approx=approx_mish)

    # padded-image rows [r0, r0 + tile_h + 4) = output rows [r0, r0 + tile_h)
    # plus the 2-row halo on each side.  With tile_h = H there is exactly one
    # h-step per batch and r0 constant-folds to 0.
    r0 = pl.multiple_of(pl.program_id(1) * tile_h, tile_h)
    xs = x_ref[0, pl.ds(r0, halo_rows), :]                    # (tile_h+4, (W+4)*Cin)

    # --- conv1: 1x1 conv (+fused BN) + Mish, bf16 operands on the MXU -------
    z1 = jnp.dot(xs.astype(w1_ref.dtype), w1_ref[...],
                 preferred_element_type=jnp.float32) + b1_ref[...]
    # Zero the rows belonging to the image's zero-padding halo (b1 makes them
    # non-zero otherwise).  The W-halo lane groups are already exactly zero:
    # x is zero there, the wrapper zeroes b1 for those groups, mish(0) == 0.
    grow = r0 + lax.broadcasted_iota(jnp.int32, (halo_rows, 1), 0)
    inside = (grow >= PAD) & (grow < H + PAD)
    y1 = jnp.where(inside, mish(z1), 0.0)                     # (tile_h+4, (W+4)*Cmid)

    # --- conv2: merged 5x5 depthwise (branches + norm BN fused) -------------
    # dx-outer / dy-inner: one lane-group shift per dx (5 total, XLU), reused
    # across the 5 dy taps; each tap weight is a plain aligned VMEM load of a
    # pre-broadcast row block (no per-tap sublane broadcast).
    acc = jnp.zeros((tile_h, mid_l), jnp.float32)
    for dx in range(K):
        col = y1[:, dx * Cmid:dx * Cmid + mid_l]               # lane shift (once per dx)
        for dy in range(K):
            acc = acc + col[dy:dy + tile_h, :] * dwk_ref[dy * K + dx]
    y2 = mish(acc + dwb_ref[...])                              # (tile_h, W*Cmid)

    # --- one_conv: 1x1 conv (+fused BN) + Mish, lane-dense (W*Cout = 128) ---
    z3 = jnp.dot(y2.astype(w3_ref.dtype), w3_ref[...],
                 preferred_element_type=jnp.float32) + b3_ref[...]
    o_ref[0] = mish(z3).astype(o_ref.dtype)


# ------------------------------ glue (JAX) -------------------------------- #
def _bn_affine(bn):
    scale = bn["gamma"] / jnp.sqrt(bn["var"] + EPS)
    bias = bn["beta"] - bn["mean"] * scale
    return scale, bias


def build_fused_params(raw):
    """Fuse all BatchNorms and merge the dilated-reparam branches (exact math)."""
    # conv1
    s1, b1 = _bn_affine(raw["bn1"])
    w1 = raw["w1"] * s1[None, :]                              # (Cin, Cmid)

    # DilatedReparamBlock branches (kersize=5 -> kernels [3, 1], dilates [1, 1])
    s5, o5 = _bn_affine(raw["bn_dw5"])
    s3, o3 = _bn_affine(raw["bn_dw3"])
    sk1, ok1 = _bn_affine(raw["bn_dw1"])
    sn, on = _bn_affine(raw["bn_norm"])

    k5 = raw["k5"][:, 0]                                      # (Cmid, 5, 5)
    k3 = jnp.pad(raw["k3"][:, 0], ((0, 0), (1, 1), (1, 1)))   # -> (Cmid, 5, 5)
    k1 = jnp.pad(raw["k1"][:, 0], ((0, 0), (2, 2), (2, 2)))   # -> (Cmid, 5, 5)
    Kdw = (s5[:, None, None] * k5 + s3[:, None, None] * k3
           + sk1[:, None, None] * k1)
    Kdw = sn[:, None, None] * Kdw                             # fold outer norm BN
    dwb = sn * (o5 + o3 + ok1) + on                           # (Cmid,)
    dwk = jnp.transpose(Kdw, (1, 2, 0)).reshape(K * K, -1)    # tap-major (25, Cmid)

    # one_conv
    s3c, b3c = _bn_affine(raw["bn3"])
    w3 = raw["w3"] * s3c[None, :]                             # (Cmid, Cout)

    return dict(w1=w1, b1=b1, dwk=dwk, dwb=dwb, w3=w3, b3=b3c)


def _fold_lane_params(fp, W, mxu_dtype):
    """Fold per-pixel weights into the W-in-lanes layout used by the kernel.

    NOTE: the kron(I_W, w) block-diagonal trick is only sensible at small
    W/Cmid (here W=16, Cmid=4); at real MAF-YOLO feature-map sizes switch to a
    channels-in-lanes layout with M = tile_h*W rows (review item).
    """
    Wp = W + 2 * PAD
    Cin, Cmid = fp["w1"].shape
    eye_wp = jnp.eye(Wp, dtype=jnp.float32)
    eye_w = jnp.eye(W, dtype=jnp.float32)

    w1_big = jnp.kron(eye_wp, fp["w1"]).astype(mxu_dtype)     # (Wp*Cin, Wp*Cmid)
    b1_big = jnp.tile(fp["b1"], Wp)                           # (Wp*Cmid,)
    wgrp = jnp.arange(Wp * Cmid) // Cmid
    # zero the bias on the W-halo lane groups so y1 is exactly zero there
    b1_big = jnp.where((wgrp >= PAD) & (wgrp < Wp - PAD), b1_big, 0.0)

    dwk_big = jnp.tile(fp["dwk"], (1, W))                     # (K*K, W*Cmid)
    dwb_big = jnp.tile(fp["dwb"], W)                          # (W*Cmid,)

    w3_big = jnp.kron(eye_w, fp["w3"]).astype(mxu_dtype)      # (W*Cmid, W*Cout)
    b3_big = jnp.tile(fp["b3"], W)                            # (W*Cout,)

    return dict(w1=w1_big, b1=b1_big[None, :], dwk=dwk_big, dwb=dwb_big[None, :],
                w3=w3_big, b3=b3_big[None, :])


def depth_bottleneck_uni(x_nchw, fp, *, tile_h=None, fast=True):
    # Boundary layout adapters (gone in an NHWC end-to-end model).
    x = jnp.transpose(x_nchw, (0, 2, 3, 1)).astype(jnp.float32)   # NCHW -> NHWC
    B, H, W, Cin = x.shape
    Cmid = fp["w1"].shape[1]
    Cout = fp["w3"].shape[1]

    if tile_h is None:
        tile_h = H if H <= 64 else 32       # review: one h-step per batch here
    tile_h = min(tile_h, H)
    assert H % tile_h == 0 and (tile_h % 8 == 0 or tile_h == H), (H, tile_h)

    mxu_dtype = jnp.bfloat16 if fast else jnp.float32
    lp = _fold_lane_params(fp, W, mxu_dtype)

    Hp, Wp = H + 2 * PAD, W + 2 * PAD
    # TODO(synk): fold this zero-pad (an extra HBM round trip of x, flagged for
    # v5e) into the kernel; at 16x16 it is noise next to the NCHW adapters.
    x_pad = jnp.pad(x, ((0, 0), (PAD, PAD), (PAD, PAD), (0, 0)))
    x_flat = x_pad.reshape(B, Hp, Wp * Cin)                   # fold W into lanes

    in_l = Wp * Cin
    mid_l = W * Cmid
    out_l = W * Cout                                          # 16 * 8 = 128 lanes

    # depthwise taps pre-broadcast along sublanes: each tap in the inner loop
    # becomes one aligned (tile_h, W*Cmid) VMEM load instead of an XLU
    # row-extract + sublane broadcast.  ~100 KB at this size.
    dwk_b = jnp.broadcast_to(lp["dwk"][:, None, :], (K * K, tile_h, mid_l))

    kernel = functools.partial(depth_bottleneck_kernel, H=H, W=W, Cmid=Cmid,
                               tile_h=tile_h, approx_mish=fast)

    def _const(shape):
        # NOTE: pipeline_mode=pl.Buffered(1) would halve the VMEM of these
        # constant-index blocks (review item for v7x at real sizes); left at
        # the default here since the full weight set is < 0.2 MiB.
        ndim = len(shape)
        return pl.BlockSpec(shape, lambda b, h: (0,) * ndim)

    out_flat = pl.pallas_call(
        kernel,
        out_shape=jax.ShapeDtypeStruct((B, H, out_l), jnp.float32),
        grid=(B, H // tile_h),
        in_specs=[
            # padded input stays resident per batch (block index ignores h);
            # the kernel slices its (tile_h + 4)-row halo window with pl.ds.
            pl.BlockSpec((1, Hp, in_l), lambda b, h: (b, 0, 0)),
            _const(lp["w1"].shape),
            _const(lp["b1"].shape),
            _const(dwk_b.shape),
            _const(lp["dwb"].shape),
            _const(lp["w3"].shape),
            _const(lp["b3"].shape),
        ],
        out_specs=pl.BlockSpec((1, tile_h, out_l), lambda b, h: (b, h, 0)),
        compiler_params=pltpu.CompilerParams(
            dimension_semantics=("parallel", "parallel"),
            vmem_limit_bytes=32 * 1024 * 1024),
    )(x_flat, lp["w1"], lp["b1"], dwk_b, lp["dwb"], lp["w3"], lp["b3"])

    out = out_flat.reshape(B, H, W, Cout)
    return jnp.transpose(out, (0, 3, 1, 2))                   # NHWC -> NCHW


# -------------------- pure-JAX reference (unfused path) ------------------- #
def reference_forward(x_nchw, raw):
    x = jnp.transpose(x_nchw, (0, 2, 3, 1)).astype(jnp.float32)   # NHWC

    def bn(t, p):
        return (t - p["mean"]) / jnp.sqrt(p["var"] + EPS) * p["gamma"] + p["beta"]

    def dw(t, k_torch, pad):
        C = t.shape[-1]
        kern = jnp.transpose(k_torch, (2, 3, 1, 0))           # (kh, kw, 1, C)
        return lax.conv_general_dilated(
            t, kern, (1, 1), [(pad, pad), (pad, pad)],
            dimension_numbers=("NHWC", "HWIO", "NHWC"),
            feature_group_count=C, precision=lax.Precision.HIGHEST)

    def pw(t, w):
        return jnp.einsum("bhwc,cd->bhwd", t, w, precision=lax.Precision.HIGHEST)

    # conv1
    y = _mish_ref(bn(pw(x, raw["w1"]), raw["bn1"]))
    # DilatedReparamBlock (non-deploy): sum of BN'd depthwise branches
    out = bn(dw(y, raw["k5"], 2), raw["bn_dw5"])
    out = out + bn(dw(y, raw["k3"], 1), raw["bn_dw3"])
    out = out + bn(dw(y, raw["k1"], 0), raw["bn_dw1"])
    # UniRepLKNetBlock norm, then the bottleneck's Mish
    y = _mish_ref(bn(out, raw["bn_norm"]))
    # one_conv
    y = _mish_ref(bn(pw(y, raw["w3"]), raw["bn3"]))
    return jnp.transpose(y, (0, 3, 1, 2))


# --------------------------------- main ------------------------------------ #
def _bn_init(key, c):
    k1, k2, k3, k4 = jax.random.split(key, 4)
    return dict(
        gamma=jax.random.uniform(k1, (c,), minval=0.5, maxval=1.5),
        beta=0.1 * jax.random.normal(k2, (c,)),
        mean=0.1 * jax.random.normal(k3, (c,)),
        var=jax.random.uniform(k4, (c,), minval=0.5, maxval=1.5),
    )


if __name__ == "__main__":
    # DepthBottleneckUni(in_channels=4, out_channels=8, kersize=5,
    #                    expansion_depth=1, use_depthwise=True)
    Cin, Cout = 4, 8
    Cmid = Cin * 1                                            # expansion_depth = 1

    key = jax.random.PRNGKey(0)
    keys = jax.random.split(key, 12)

    raw = dict(
        w1=0.3 * jax.random.normal(keys[0], (Cin, Cmid)),      # conv1 1x1 (Cin->Cmid)
        bn1=_bn_init(keys[1], Cmid),
        k5=0.2 * jax.random.normal(keys[2], (Cmid, 1, 5, 5)),  # lk_origin depthwise
        bn_dw5=_bn_init(keys[3], Cmid),
        k3=0.2 * jax.random.normal(keys[4], (Cmid, 1, 3, 3)),  # dil_conv_k3_1
        bn_dw3=_bn_init(keys[5], Cmid),
        k1=0.2 * jax.random.normal(keys[6], (Cmid, 1, 1, 1)),  # dil_conv_k1_1
        bn_dw1=_bn_init(keys[7], Cmid),
        bn_norm=_bn_init(keys[8], Cmid),                       # UniRepLKNetBlock.norm
        w3=0.3 * jax.random.normal(keys[9], (Cmid, Cout)),     # one_conv 1x1
        bn3=_bn_init(keys[10], Cout),
    )

    x = jax.random.normal(keys[11], (2, Cin, 16, 16), dtype=jnp.float32)  # NCHW

    fp = build_fused_params(raw)
    ref = reference_forward(x, raw)

    # 1) exact-math path (f32 MXU operands, exact Mish divide): validates the
    #    BN-fusion / branch-merge algebra against the unfused reference.
    exact_fwd = jax.jit(functools.partial(depth_bottleneck_uni, fast=False))
    out_exact = jax.block_until_ready(exact_fwd(x, fp))
    assert out_exact.shape == (2, Cout, 16, 16), out_exact.shape
    err_exact = float(jnp.max(jnp.abs(out_exact - ref)))
    assert err_exact < 5e-2, f"exact path mismatch vs reference, max abs err = {err_exact}"

    # 2) delivered fast path (bf16 MXU operands + approx-reciprocal Mish):
    #    tolerance widened per review -- bf16 operand rounding through the
    #    BN-fused convs dominates the error budget.
    fast_fwd = jax.jit(depth_bottleneck_uni)
    out_fast = jax.block_until_ready(fast_fwd(x, fp))
    assert out_fast.shape == (2, Cout, 16, 16), out_fast.shape
    err_fast = float(jnp.max(jnp.abs(out_fast - ref)))
    assert err_fast < 2e-1, f"fast path mismatch vs reference, max abs err = {err_fast}"

    print("KERNEL_OK")
</pallas_src>

<mosaic_0001>
module attributes {stable_mosaic.version = 11 : i64} {
  func.func @depth_bottleneck_kernel(%arg0: i32, %arg1: i32, %arg2: memref<1x20x80xf32, #tpu.memory_space<vmem>>, %arg3: memref<80x80xf32, #tpu.memory_space<vmem>>, %arg4: memref<1x80xf32, #tpu.memory_space<vmem>>, %arg5: memref<25x16x64xf32, #tpu.memory_space<vmem>>, %arg6: memref<1x64xf32, #tpu.memory_space<vmem>>, %arg7: memref<64x128xf32, #tpu.memory_space<vmem>>, %arg8: memref<1x128xf32, #tpu.memory_space<vmem>>, %arg9: memref<1x16x128xf32, #tpu.memory_space<vmem>>) attributes {dimension_semantics = [#tpu.dimension_semantics<parallel>, #tpu.dimension_semantics<parallel>], iteration_bounds = array<i64: 2, 1>, scalar_prefetch = 0 : i64, scratch_operands = 0 : i64, tpu.core_type = #tpu.core_type<tc>, window_params = [{transform_indices = @transform_0, window_bounds = array<i64: 1, 20, 80>}, {pipeline_mode = #tpu.pipeline_mode<synchronous>, transform_indices = @transform_1, window_bounds = array<i64: 80, 80>}, {pipeline_mode = #tpu.pipeline_mode<synchronous>, transform_indices = @transform_2, window_bounds = array<i64: 1, 80>}, {pipeline_mode = #tpu.pipeline_mode<synchronous>, transform_indices = @transform_3, window_bounds = array<i64: 25, 16, 64>}, {pipeline_mode = #tpu.pipeline_mode<synchronous>, transform_indices = @transform_4, window_bounds = array<i64: 1, 64>}, {pipeline_mode = #tpu.pipeline_mode<synchronous>, transform_indices = @transform_5, window_bounds = array<i64: 64, 128>}, {pipeline_mode = #tpu.pipeline_mode<synchronous>, transform_indices = @transform_6, window_bounds = array<i64: 1, 128>}, {transform_indices = @transform_7, window_bounds = array<i64: 1, 16, 128>}]} {
    %c16_i32 = arith.constant 16 : i32
    %0 = arith.muli %arg1, %c16_i32 : i32
    %1 = tpu.assume_multiple %0, 16 : i32
    %c0 = arith.constant 0 : index
    %2 = arith.index_cast %1 : i32 to index
    %c0_0 = arith.constant 0 : index
    %3 = vector.load %arg2[%c0, %2, %c0_0] : memref<1x20x80xf32, #tpu.memory_space<vmem>>, vector<1x20x80xf32>
    %4 = vector.shape_cast %3 : vector<1x20x80xf32> to vector<20x80xf32>
    %c0_1 = arith.constant 0 : index
    %c0_2 = arith.constant 0 : index
    %5 = vector.load %arg3[%c0_1, %c0_2] : memref<80x80xf32, #tpu.memory_space<vmem>>, vector<80x80xf32>
    %cst = arith.constant dense<0.000000e+00> : vector<20x80xf32>
    %6 = tpu.matmul %4, %5, %cst {dimension_numbers = #tpu.dot_dimension_numbers<[1], [0], [0], [1], [0, 0, 1, 1], [], []>} : vector<20x80xf32>, vector<80x80xf32>, vector<20x80xf32> -> vector<20x80xf32>
    %c0_3 = arith.constant 0 : index
    %c0_4 = arith.constant 0 : index
    %7 = vector.load %arg4[%c0_3, %c0_4] : memref<1x80xf32, #tpu.memory_space<vmem>>, vector<1x80xf32>
    %8 = vector.broadcast %7 : vector<1x80xf32> to vector<20x80xf32>
    %9 = arith.addf %6, %8 : vector<20x80xf32>
    %10 = tpu.iota {dimensions = array<i32: 0>} : vector<20x1xi32>
    %11 = vector.broadcast %1 : i32 to vector<20x1xi32>
    %12 = arith.addi %11, %10 : vector<20x1xi32>
    %c2_i32 = arith.constant 2 : i32
    %13 = vector.broadcast %c2_i32 : i32 to vector<20x1xi32>
    %14 = arith.cmpi sge, %12, %13 : vector<20x1xi32>
    %c18_i32 = arith.constant 18 : i32
    %15 = vector.broadcast %c18_i32 : i32 to vector<20x1xi32>
    %16 = arith.cmpi slt, %12, %15 : vector<20x1xi32>
    %17 = arith.andi %14, %16 : vector<20x1xi1>
    %cst_5 = arith.constant 2.000000e+01 : f32
    %18 = vector.broadcast %cst_5 : f32 to vector<20x80xf32>
    %19 = arith.minimumf %9, %18 : vector<20x80xf32>
    %20 = math.exp %19 : vector<20x80xf32>
    %cst_6 = arith.constant 2.000000e+00 : f32
    %21 = vector.broadcast %cst_6 : f32 to vector<20x80xf32>
    %22 = arith.addf %20, %21 : vector<20x80xf32>
    %23 = arith.mulf %20, %22 : vector<20x80xf32>
    %cst_7 = arith.constant 2.000000e+00 : f32
    %24 = vector.broadcast %cst_7 : f32 to vector<20x80xf32>
    %25 = arith.addf %23, %24 : vector<20x80xf32>
    %26 = arith.divf %23, %25 : vector<20x80xf32>
    %27 = arith.mulf %9, %26 : vector<20x80xf32>
    %cst_8 = arith.constant 0.000000e+00 : f32
    %28 = vector.shape_cast %17 : vector<20x1xi1> to vector<20x1xi1>
    %29 = vector.broadcast %28 : vector<20x1xi1> to vector<20x80xi1>
    %30 = vector.broadcast %cst_8 : f32 to vector<20x80xf32>
    %31 = arith.select %29, %27, %30 : vector<20x80xi1>, vector<20x80xf32>
    %cst_9 = arith.constant 0.000000e+00 : f32
    %32 = vector.broadcast %cst_9 : f32 to vector<16x64xf32>
    %33 = vector.extract_strided_slice %31 {offsets = [0, 0], sizes = [20, 64], strides = [1, 1]} : vector<20x80xf32> to vector<20x64xf32>
    %34 = vector.extract_strided_slice %33 {offsets = [0, 0], sizes = [16, 64], strides = [1, 1]} : vector<20x64xf32> to vector<16x64xf32>
    %c0_10 = arith.constant 0 : index
    %c0_11 = arith.constant 0 : index
    %c0_12 = arith.constant 0 : index
    %35 = vector.load %arg5[%c0_10, %c0_11, %c0_12] : memref<25x16x64xf32, #tpu.memory_space<vmem>>, vector<1x16x64xf32>
    %36 = vector.shape_cast %35 : vector<1x16x64xf32> to vector<16x64xf32>
    %37 = arith.mulf %34, %36 : vector<16x64xf32>
    %38 = arith.addf %32, %37 : vector<16x64xf32>
    %39 = vector.extract_strided_slice %33 {offsets = [1, 0], sizes = [16, 64], strides = [1, 1]} : vector<20x64xf32> to vector<16x64xf32>
    %c5 = arith.constant 5 : index
    %c0_13 = arith.constant 0 : index
    %c0_14 = arith.constant 0 : index
    %40 = vector.load %arg5[%c5, %c0_13, %c0_14] : memref<25x16x64xf32, #tpu.memory_space<vmem>>, vector<1x16x64xf32>
    %41 = vector.shape_cast %40 : vector<1x16x64xf32> to vector<16x64xf32>
    %42 = arith.mulf %39, %41 : vector<16x64xf32>
    %43 = arith.addf %38, %42 : vector<16x64xf32>
    %44 = vector.extract_strided_slice %33 {offsets = [2, 0], sizes = [16, 64], strides = [1, 1]} : vector<20x64xf32> to vector<16x64xf32>
    %c10 = arith.constant 10 : index
    %c0_15 = arith.constant 0 : index
    %c0_16 = arith.constant 0 : index
    %45 = vector.load %arg5[%c10, %c0_15, %c0_16] : memref<25x16x64xf32, #tpu.memory_space<vmem>>, vector<1x16x64xf32>
    %46 = vector.shape_cast %45 : vector<1x16x64xf32> to vector<16x64xf32>
    %47 = arith.mulf %44, %46 : vector<16x64xf32>
    %48 = arith.addf %43, %47 : vector<16x64xf32>
    %49 = vector.extract_strided_slice %33 {offsets = [3, 0], sizes = [16, 64], strides = [1, 1]} : vector<20x64xf32> to vector<16x64xf32>
    %c15 = arith.constant 15 : index
    %c0_17 = arith.constant 0 : index
    %c0_18 = arith.constant 0 : index
    %50 = vector.load %arg5[%c15, %c0_17, %c0_18] : memref<25x16x64xf32, #tpu.memory_space<vmem>>, vector<1x16x64xf32>
    %51 = vector.shape_cast %50 : vector<1x16x64xf32> to vector<16x64xf32>
    %52 = arith.mulf %49, %51 : vector<16x64xf32>
    %53 = arith.addf %48, %52 : vector<16x64xf32>
    %54 = vector.extract_strided_slice %33 {offsets = [4, 0], sizes = [16, 64], strides = [1, 1]} : vector<20x64xf32> to vector<16x64xf32>
    %c20 = arith.constant 20 : index
    %c0_19 = arith.constant 0 : index
    %c0_20 = arith.constant 0 : index
    %55 = vector.load %arg5[%c20, %c0_19, %c0_20] : memref<25x16x64xf32, #tpu.memory_space<vmem>>, vector<1x16x64xf32>
    %56 = vector.shape_cast %55 : vector<1x16x64xf32> to vector<16x64xf32>
    %57 = arith.mulf %54, %56 : vector<16x64xf32>
    %58 = arith.addf %53, %57 : vector<16x64xf32>
    %59 = vector.extract_strided_slice %31 {offsets = [0, 4], sizes = [20, 64], strides = [1, 1]} : vector<20x80xf32> to vector<20x64xf32>
    %60 = vector.extract_strided_slice %59 {offsets = [0, 0], sizes = [16, 64], strides = [1, 1]} : vector<20x64xf32> to vector<16x64xf32>
    %c1 = arith.constant 1 : index
    %c0_21 = arith.constant 0 : index
    %c0_22 = arith.constant 0 : index
    %61 = vector.load %arg5[%c1, %c0_21, %c0_22] : memref<25x16x64xf32, #tpu.memory_space<vmem>>, vector<1x16x64xf32>
    %62 = vector.shape_cast %61 : vector<1x16x64xf32> to vector<16x64xf32>
    %63 = arith.mulf %60, %62 : vector<16x64xf32>
    %64 = arith.addf %58, %63 : vector<16x64xf32>
    %65 = vector.extract_strided_slice %59 {offsets = [1, 0], sizes = [16, 64], strides = [1, 1]} : vector<20x64xf32> to vector<16x64xf32>
    %c6 = arith.constant 6 : index
    %c0_23 = arith.constant 0 : index
    %c0_24 = arith.constant 0 : index
    %66 = vector.load %arg5[%c6, %c0_23, %c0_24] : memref<25x16x64xf32, #tpu.memory_space<vmem>>, vector<1x16x64xf32>
    %67 = vector.shape_cast %66 : vector<1x16x64xf32> to vector<16x64xf32>
    %68 = arith.mulf %65, %67 : vector<16x64xf32>
    %69 = arith.addf %64, %68 : vector<16x64xf32>
    %70 = vector.extract_strided_slice %59 {offsets = [2, 0], sizes = [16, 64], strides = [1, 1]} : vector<20x64xf32> to vector<16x64xf32>
    %c11 = arith.constant 11 : index
    %c0_25 = arith.constant 0 : index
    %c0_26 = arith.constant 0 : index
    %71 = vector.load %arg5[%c11, %c0_25, %c0_26] : memref<25x16x64xf32, #tpu.memory_space<vmem>>, vector<1x16x64xf32>
    %72 = vector.shape_cast %71 : vector<1x16x64xf32> to vector<16x64xf32>
    %73 = arith.mulf %70, %72 : vector<16x64xf32>
    %74 = arith.addf %69, %73 : vector<16x64xf32>
    %75 = vector.extract_strided_slice %59 {offsets = [3, 0], sizes = [16, 64], strides = [1, 1]} : vector<20x64xf32> to vector<16x64xf32>
    %c16 = arith.constant 16 : index
    %c0_27 = arith.constant 0 : index
    %c0_28 = arith.constant 0 : index
    %76 = vector.load %arg5[%c16, %c0_27, %c0_28] : memref<25x16x64xf32, #tpu.memory_space<vmem>>, vector<1x16x64xf32>
    %77 = vector.shape_cast %76 : vector<1x16x64xf32> to vector<16x64xf32>
    %78 = arith.mulf %75, %77 : vector<16x64xf32>
    %79 = arith.addf %74, %78 : vector<16x64xf32>
    %80 = vector.extract_strided_slice %59 {offsets = [4, 0], sizes = [16, 64], strides = [1, 1]} : vector<20x64xf32> to vector<16x64xf32>
    %c21 = arith.constant 21 : index
    %c0_29 = arith.constant 0 : index
    %c0_30 = arith.constant 0 : index
    %81 = vector.load %arg5[%c21, %c0_29, %c0_30] : memref<25x16x64xf32, #tpu.memory_space<vmem>>, vector<1x16x64xf32>
    %82 = vector.shape_cast %81 : vector<1x16x64xf32> to vector<16x64xf32>
    %83 = arith.mulf %80, %82 : vector<16x64xf32>
    %84 = arith.addf %79, %83 : vector<16x64xf32>
    %85 = vector.extract_strided_slice %31 {offsets = [0, 8], sizes = [20, 64], strides = [1, 1]} : vector<20x80xf32> to vector<20x64xf32>
    %86 = vector.extract_strided_slice %85 {offsets = [0, 0], sizes = [16, 64], strides = [1, 1]} : vector<20x64xf32> to vector<16x64xf32>
    %c2 = arith.constant 2 : index
    %c0_31 = arith.constant 0 : index
    %c0_32 = arith.constant 0 : index
    %87 = vector.load %arg5[%c2, %c0_31, %c0_32] : memref<25x16x64xf32, #tpu.memory_space<vmem>>, vector<1x16x64xf32>
    %88 = vector.shape_cast %87 : vector<1x16x64xf32> to vector<16x64xf32>
    %89 = arith.mulf %86, %88 : vector<16x64xf32>
    %90 = arith.addf %84, %89 : vector<16x64xf32>
    %91 = vector.extract_strided_slice %85 {offsets = [1, 0], sizes = [16, 64], strides = [1, 1]} : vector<20x64xf32> to vector<16x64xf32>
    %c7 = arith.constant 7 : index
    %c0_33 = arith.constant 0 : index
    %c0_34 = arith.constant 0 : index
    %92 = vector.load %arg5[%c7, %c0_33, %c0_34] : memref<25x16x64xf32, #tpu.memory_space<vmem>>, vector<1x16x64xf32>
    %93 = vector.shape_cast %92 : vector<1x16x64xf32> to vector<16x64xf32>
    %94 = arith.mulf %91, %93 : vector<16x64xf32>
    %95 = arith.addf %90, %94 : vector<16x64xf32>
    %96 = vector.extract_strided_slice %85 {offsets = [2, 0], sizes = [16, 64], strides = [1, 1]} : vector<20x64xf32> to vector<16x64xf32>
    %c12 = arith.constant 12 : index
    %c0_35 = arith.constant 0 : index
    %c0_36 = arith.constant 0 : index
    %97 = vector.load %arg5[%c12, %c0_35, %c0_36] : memref<25x16x64xf32, #tpu.memory_space<vmem>>, vector<1x16x64xf32>
    %98 = vector.shape_cast %97 : vector<1x16x64xf32> to vector<16x64xf32>
    %99 = arith.mulf %96, %98 : vector<16x64xf32>
    %100 = arith.addf %95, %99 : vector<16x64xf32>
    %101 = vector.extract_strided_slice %85 {offsets = [3, 0], sizes = [16, 64], strides = [1, 1]} : vector<20x64xf32> to vector<16x64xf32>
    %c17 = arith.constant 17 : index
    %c0_37 = arith.constant 0 : index
    %c0_38 = arith.constant 0 : index
    %102 = vector.load %arg5[%c17, %c0_37, %c0_38] : memref<25x16x64xf32, #tpu.memory_space<vmem>>, vector<1x16x64xf32>
    %103 = vector.shape_cast %102 : vector<1x16x64xf32> to vector<16x64xf32>
    %104 = arith.mulf %101, %103 : vector<16x64xf32>
    %105 = arith.addf %100, %104 : vector<16x64xf32>
    %106 = vector.extract_strided_slice %85 {offsets = [4, 0], sizes = [16, 64], strides = [1, 1]} : vector<20x64xf32> to vector<16x64xf32>
    %c22 = arith.constant 22 : index
    %c0_39 = arith.constant 0 : index
    %c0_40 = arith.constant 0 : index
    %107 = vector.load %arg5[%c22, %c0_39, %c0_40] : memref<25x16x64xf32, #tpu.memory_space<vmem>>, vector<1x16x64xf32>
    %108 = vector.shape_cast %107 : vector<1x16x64xf32> to vector<16x64xf32>
    %109 = arith.mulf %106, %108 : vector<16x64xf32>
    %110 = arith.addf %105, %109 : vector<16x64xf32>
    %111 = vector.extract_strided_slice %31 {offsets = [0, 12], sizes = [20, 64], strides = [1, 1]} : vector<20x80xf32> to vector<20x64xf32>
    %112 = vector.extract_strided_slice %111 {offsets = [0, 0], sizes = [16, 64], strides = [1, 1]} : vector<20x64xf32> to vector<16x64xf32>
    %c3 = arith.constant 3 : index
    %c0_41 = arith.constant 0 : index
    %c0_42 = arith.constant 0 : index
    %113 = vector.load %arg5[%c3, %c0_41, %c0_42] : memref<25x16x64xf32, #tpu.memory_space<vmem>>, vector<1x16x64xf32>
    %114 = vector.shape_cast %113 : vector<1x16x64xf32> to vector<16x64xf32>
    %115 = arith.mulf %112, %114 : vector<16x64xf32>
    %116 = arith.addf %110, %115 : vector<16x64xf32>
    %117 = vector.extract_strided_slice %111 {offsets = [1, 0], sizes = [16, 64], strides = [1, 1]} : vector<20x64xf32> to vector<16x64xf32>
    %c8 = arith.constant 8 : index
    %c0_43 = arith.constant 0 : index
    %c0_44 = arith.constant 0 : index
    %118 = vector.load %arg5[%c8, %c0_43, %c0_44] : memref<25x16x64xf32, #tpu.memory_space<vmem>>, vector<1x16x64xf32>
    %119 = vector.shape_cast %118 : vector<1x16x64xf32> to vector<16x64xf32>
    %120 = arith.mulf %117, %119 : vector<16x64xf32>
    %121 = arith.addf %116, %120 : vector<16x64xf32>
    %122 = vector.extract_strided_slice %111 {offsets = [2, 0], sizes = [16, 64], strides = [1, 1]} : vector<20x64xf32> to vector<16x64xf32>
    %c13 = arith.constant 13 : index
    %c0_45 = arith.constant 0 : index
    %c0_46 = arith.constant 0 : index
    %123 = vector.load %arg5[%c13, %c0_45, %c0_46] : memref<25x16x64xf32, #tpu.memory_space<vmem>>, vector<1x16x64xf32>
    %124 = vector.shape_cast %123 : vector<1x16x64xf32> to vector<16x64xf32>
    %125 = arith.mulf %122, %124 : vector<16x64xf32>
    %126 = arith.addf %121, %125 : vector<16x64xf32>
    %127 = vector.extract_strided_slice %111 {offsets = [3, 0], sizes = [16, 64], strides = [1, 1]} : vector<20x64xf32> to vector<16x64xf32>
    %c18 = arith.constant 18 : index
    %c0_47 = arith.constant 0 : index
    %c0_48 = arith.constant 0 : index
    %128 = vector.load %arg5[%c18, %c0_47, %c0_48] : memref<25x16x64xf32, #tpu.memory_space<vmem>>, vector<1x16x64xf32>
    %129 = vector.shape_cast %128 : vector<1x16x64xf32> to vector<16x64xf32>
    %130 = arith.mulf %127, %129 : vector<16x64xf32>
    %131 = arith.addf %126, %130 : vector<16x64xf32>
    %132 = vector.extract_strided_slice %111 {offsets = [4, 0], sizes = [16, 64], strides = [1, 1]} : vector<20x64xf32> to vector<16x64xf32>
    %c23 = arith.constant 23 : index
    %c0_49 = arith.constant 0 : index
    %c0_50 = arith.constant 0 : index
    %133 = vector.load %arg5[%c23, %c0_49, %c0_50] : memref<25x16x64xf32, #tpu.memory_space<vmem>>, vector<1x16x64xf32>
    %134 = vector.shape_cast %133 : vector<1x16x64xf32> to vector<16x64xf32>
    %135 = arith.mulf %132, %134 : vector<16x64xf32>
    %136 = arith.addf %131, %135 : vector<16x64xf32>
    %137 = vector.extract_strided_slice %31 {offsets = [0, 16], sizes = [20, 64], strides = [1, 1]} : vector<20x80xf32> to vector<20x64xf32>
    %138 = vector.extract_strided_slice %137 {offsets = [0, 0], sizes = [16, 64], strides = [1, 1]} : vector<20x64xf32> to vector<16x64xf32>
    %c4 = arith.constant 4 : index
    %c0_51 = arith.constant 0 : index
    %c0_52 = arith.constant 0 : index
    %139 = vector.load %arg5[%c4, %c0_51, %c0_52] : memref<25x16x64xf32, #tpu.memory_space<vmem>>, vector<1x16x64xf32>
    %140 = vector.shape_cast %139 : vector<1x16x64xf32> to vector<16x64xf32>
    %141 = arith.mulf %138, %140 : vector<16x64xf32>
    %142 = arith.addf %136, %141 : vector<16x64xf32>
    %143 = vector.extract_strided_slice %137 {offsets = [1, 0], sizes = [16, 64], strides = [1, 1]} : vector<20x64xf32> to vector<16x64xf32>
    %c9 = arith.constant 9 : index
    %c0_53 = arith.constant 0 : index
    %c0_54 = arith.constant 0 : index
    %144 = vector.load %arg5[%c9, %c0_53, %c0_54] : memref<25x16x64xf32, #tpu.memory_space<vmem>>, vector<1x16x64xf32>
    %145 = vector.shape_cast %144 : vector<1x16x64xf32> to vector<16x64xf32>
    %146 = arith.mulf %143, %145 : vector<16x64xf32>
    %147 = arith.addf %142, %146 : vector<16x64xf32>
    %148 = vector.extract_strided_slice %137 {offsets = [2, 0], sizes = [16, 64], strides = [1, 1]} : vector<20x64xf32> to vector<16x64xf32>
    %c14 = arith.constant 14 : index
    %c0_55 = arith.constant 0 : index
    %c0_56 = arith.constant 0 : index
    %149 = vector.load %arg5[%c14, %c0_55, %c0_56] : memref<25x16x64xf32, #tpu.memory_space<vmem>>, vector<1x16x64xf32>
    %150 = vector.shape_cast %149 : vector<1x16x64xf32> to vector<16x64xf32>
    %151 = arith.mulf %148, %150 : vector<16x64xf32>
    %152 = arith.addf %147, %151 : vector<16x64xf32>
    %153 = vector.extract_strided_slice %137 {offsets = [3, 0], sizes = [16, 64], strides = [1, 1]} : vector<20x64xf32> to vector<16x64xf32>
    %c19 = arith.constant 19 : index
    %c0_57 = arith.constant 0 : index
    %c0_58 = arith.constant 0 : index
    %154 = vector.load %arg5[%c19, %c0_57, %c0_58] : memref<25x16x64xf32, #tpu.memory_space<vmem>>, vector<1x16x64xf32>
    %155 = vector.shape_cast %154 : vector<1x16x64xf32> to vector<16x64xf32>
    %156 = arith.mulf %153, %155 : vector<16x64xf32>
    %157 = arith.addf %152, %156 : vector<16x64xf32>
    %158 = vector.extract_strided_slice %137 {offsets = [4, 0], sizes = [16, 64], strides = [1, 1]} : vector<20x64xf32> to vector<16x64xf32>
    %c24 = arith.constant 24 : index
    %c0_59 = arith.constant 0 : index
    %c0_60 = arith.constant 0 : index
    %159 = vector.load %arg5[%c24, %c0_59, %c0_60] : memref<25x16x64xf32, #tpu.memory_space<vmem>>, vector<1x16x64xf32>
    %160 = vector.shape_cast %159 : vector<1x16x64xf32> to vector<16x64xf32>
    %161 = arith.mulf %158, %160 : vector<16x64xf32>
    %162 = arith.addf %157, %161 : vector<16x64xf32>
    %c0_61 = arith.constant 0 : index
    %c0_62 = arith.constant 0 : index
    %163 = vector.load %arg6[%c0_61, %c0_62] : memref<1x64xf32, #tpu.memory_space<vmem>>, vector<1x64xf32>
    %164 = vector.broadcast %163 : vector<1x64xf32> to vector<16x64xf32>
    %165 = arith.addf %162, %164 : vector<16x64xf32>
    %cst_63 = arith.constant 2.000000e+01 : f32
    %166 = vector.broadcast %cst_63 : f32 to vector<16x64xf32>
    %167 = arith.minimumf %165, %166 : vector<16x64xf32>
    %168 = math.exp %167 : vector<16x64xf32>
    %cst_64 = arith.constant 2.000000e+00 : f32
    %169 = vector.broadcast %cst_64 : f32 to vector<16x64xf32>
    %170 = arith.addf %168, %169 : vector<16x64xf32>
    %171 = arith.mulf %168, %170 : vector<16x64xf32>
    %cst_65 = arith.constant 2.000000e+00 : f32
    %172 = vector.broadcast %cst_65 : f32 to vector<16x64xf32>
    %173 = arith.addf %171, %172 : vector<16x64xf32>
    %174 = arith.divf %171, %173 : vector<16x64xf32>
    %175 = arith.mulf %165, %174 : vector<16x64xf32>
    %c0_66 = arith.constant 0 : index
    %c0_67 = arith.constant 0 : index
    %176 = vector.load %arg7[%c0_66, %c0_67] : memref<64x128xf32, #tpu.memory_space<vmem>>, vector<64x128xf32>
    %cst_68 = arith.constant dense<0.000000e+00> : vector<16x128xf32>
    %177 = tpu.matmul %175, %176, %cst_68 {dimension_numbers = #tpu.dot_dimension_numbers<[1], [0], [0], [1], [0, 0, 1, 1], [], []>} : vector<16x64xf32>, vector<64x128xf32>, vector<16x128xf32> -> vector<16x128xf32>
    %c0_69 = arith.constant 0 : index
    %c0_70 = arith.constant 0 : index
    %178 = vector.load %arg8[%c0_69, %c0_70] : memref<1x128xf32, #tpu.memory_space<vmem>>, vector<1x128xf32>
    %179 = vector.broadcast %178 : vector<1x128xf32> to vector<16x128xf32>
    %180 = arith.addf %177, %179 : vector<16x128xf32>
    %cst_71 = arith.constant 2.000000e+01 : f32
    %181 = vector.broadcast %cst_71 : f32 to vector<16x128xf32>
    %182 = arith.minimumf %180, %181 : vector<16x128xf32>
    %183 = math.exp %182 : vector<16x128xf32>
    %cst_72 = arith.constant 2.000000e+00 : f32
    %184 = vector.broadcast %cst_72 : f32 to vector<16x128xf32>
    %185 = arith.addf %183, %184 : vector<16x128xf32>
    %186 = arith.mulf %183, %185 : vector<16x128xf32>
    %cst_73 = arith.constant 2.000000e+00 : f32
    %187 = vector.broadcast %cst_73 : f32 to vector<16x128xf32>
    %188 = arith.addf %186, %187 : vector<16x128xf32>
    %189 = arith.divf %186, %188 : vector<16x128xf32>
    %190 = arith.mulf %180, %189 : vector<16x128xf32>
    %c0_74 = arith.constant 0 : index
    %c0_75 = arith.constant 0 : index
    %c0_76 = arith.constant 0 : index
    %191 = vector.load %arg9[%c0_74, %c0_75, %c0_76] : memref<1x16x128xf32, #tpu.memory_space<vmem>>, vector<1x16x128xf32>
    %192 = vector.shape_cast %191 : vector<1x16x128xf32> to vector<16x128xf32>
    %193 = vector.shape_cast %190 : vector<16x128xf32> to vector<1x16x128xf32>
    tpu.vector_store %arg9[%c0_74, %c0_75, %c0_76], %193 {strides = array<i32>} : memref<1x16x128xf32, #tpu.memory_space<vmem>>, vector<1x16x128xf32>,
    return
  }
  func.func @transform_0(%arg0: i32, %arg1: i32) -> (i32, i32, i32) {
    %c0_i32 = arith.constant 0 : i32
    %c0_i32_0 = arith.constant 0 : i32
    %c0_i32_1 = arith.constant 0 : i32
    return %arg0, %c0_i32, %c0_i32_0 : i32, i32, i32
  }
  func.func @transform_1(%arg0: i32, %arg1: i32) -> (i32, i32) {
    %c0_i32 = arith.constant 0 : i32
    %c0_i32_0 = arith.constant 0 : i32
    %c0_i32_1 = arith.constant 0 : i32
    return %c0_i32, %c0_i32_0 : i32, i32
  }
  func.func @transform_2(%arg0: i32, %arg1: i32) -> (i32, i32) {
    %c0_i32 = arith.constant 0 : i32
    %c0_i32_0 = arith.constant 0 : i32
    %c0_i32_1 = arith.constant 0 : i32
    return %c0_i32, %c0_i32_0 : i32, i32
  }
  func.func @transform_3(%arg0: i32, %arg1: i32) -> (i32, i32, i32) {
    %c0_i32 = arith.constant 0 : i32
    %c0_i32_0 = arith.constant 0 : i32
    %c0_i32_1 = arith.constant 0 : i32
    %c0_i32_2 = arith.constant 0 : i32
    return %c0_i32, %c0_i32_0, %c0_i32_1 : i32, i32, i32
  }
  func.func @transform_4(%arg0: i32, %arg1: i32) -> (i32, i32) {
    %c0_i32 = arith.constant 0 : i32
    %c0_i32_0 = arith.constant 0 : i32
    %c0_i32_1 = arith.constant 0 : i32
    return %c0_i32, %c0_i32_0 : i32, i32
  }
  func.func @transform_5(%arg0: i32, %arg1: i32) -> (i32, i32) {
    %c0_i32 = arith.constant 0 : i32
    %c0_i32_0 = arith.constant 0 : i32
    %c0_i32_1 = arith.constant 0 : i32
    return %c0_i32, %c0_i32_0 : i32, i32
  }
  func.func @transform_6(%arg0: i32, %arg1: i32) -> (i32, i32) {
    %c0_i32 = arith.constant 0 : i32
    %c0_i32_0 = arith.constant 0 : i32
    %c0_i32_1 = arith.constant 0 : i32
    return %c0_i32, %c0_i32_0 : i32, i32
  }
  func.func @transform_7(%arg0: i32, %arg1: i32) -> (i32, i32, i32) {
    %c0_i32 = arith.constant 0 : i32
    %c0_i32_0 = arith.constant 0 : i32
    return %arg0, %arg1, %c0_i32 : i32, i32, i32
  }
}

</mosaic_0001>

<llo_original>
// kernel: tile.23
$region0: #{tile.23}
  #allocation0 [shape = 's32[1]{0}', space=sflag, size = 0x4, scoped, tag = 'scoped memory for tile.23']
  %s0 = inlined_call_operand.vmem [shape: f32[4], index: 0, kind: input, shape index: {}]
  %s1 = inlined_call_operand.vmem [shape: f32[20,4], index: 1, kind: output, shape index: {}]
  // Predicated region
  $region2: #{tile.23} parent=0 // pred_check
    _
  $region3: #{tile.23} parent=0 // pred_check_branch
    %3 = sbr.rel (0) target = $region5
  $region4: #{tile.23} parent=0 // pred_region
    _
  $region5: #{tile.23} parent=0 // pred_fallthru
    _
  %v4 = vld [vmem:[%s0] ss:$0 sm:$0xff]
  %5 = vst [vmem:[%s1] sm:$0xff] %v4
  %s6 = scalar_lea.vmem %s1, 8
  %7 = vst [vmem:[%s6] sm:$0xff] %v4
  %s8 = scalar_lea.vmem %s1, 16
  %9 = vst [vmem:[%s8] sm:$0xff] %v4

// kernel: tile.32
$region0: #{tile.32}
  #allocation0 [shape = 's32[1]{0}', space=sflag, size = 0x4, scoped, tag = 'scoped memory for tile.32']
  %s0 = inlined_call_operand.vmem [shape: f32[4], index: 0, kind: input, shape index: {}]
  %s1 = inlined_call_operand.vmem [shape: f32[16,4], index: 1, kind: output, shape index: {}]
  // Predicated region
  $region2: #{tile.32} parent=0 // pred_check
    _
  $region3: #{tile.32} parent=0 // pred_check_branch
    %3 = sbr.rel (0) target = $region5
  $region4: #{tile.32} parent=0 // pred_region
    _
  $region5: #{tile.32} parent=0 // pred_fallthru
    _
  %v4 = vld [vmem:[%s0] ss:$0 sm:$0xff]
  %5 = vst [vmem:[%s1] sm:$0xff] %v4
  %s6 = scalar_lea.vmem %s1, 8
  %7 = vst [vmem:[%s6] sm:$0xff] %v4

// kernel: tile.37
$region0: #{tile.37}
  %s0 = inlined_call_operand.vmem [shape: f32[16,4], index: 0, kind: input, shape index: {}]
  %s1 = inlined_call_operand.vmem [shape: f32[1,64], index: 1, kind: output, shape index: {}]
  $region1: #{tile.37} parent=0
    #allocation0 [shape = 'u8[4096]{0}', space=vmem, size = 0x1000, scoped, tag = 'scoped mem for output reshape']
    %v2 = vld [vmem:[%s0] sm:$0x1]
    %vm3 = vcmask 31744
    %4 = vst.msk [vmem:[#allocation0] sm:$0x1] %vm3, %v2
    %s5 = scalar_lea.vmem %s0, 15
    %v6 = vld [vmem:[%s5] sm:$0x1]
    %7 = vrot.lane.b32.xlu0 %v6, 60
    %v8 = vpop.permute.xlu0 %7
    %vm9 = vcmask 523744
    %10 = vst.msk [vmem:[#allocation0] sm:$0x1] %vm9, %v8
    %s11 = scalar_lea.vmem %s0, 14
    %v12 = vld [vmem:[%s11] sm:$0x1]
    %13 = vrot.lane.b32.xlu0 %v12, 56
    %v14 = vpop.permute.xlu0 %13
    %vm15 = vcmask 490944
    %16 = vst.msk [vmem:[#allocation0] sm:$0x1] %vm15, %v14
    %s17 = scalar_lea.vmem %s0, 13
    %v18 = vld [vmem:[%s17] sm:$0x1]
    %19 = vrot.lane.b32.xlu0 %v18, 52
    %v20 = vpop.permute.xlu0 %19
    %vm21 = vcmask 458144
    %22 = vst.msk [vmem:[#allocation0] sm:$0x1] %vm21, %v20
    %s23 = scalar_lea.vmem %s0, 12
    %v24 = vld [vmem:[%s23] sm:$0x1]
    %25 = vrot.lane.b32.xlu0 %v24, 48
    %v26 = vpop.permute.xlu0 %25
    %vm27 = vcmask 425344
    %28 = vst.msk [vmem:[#allocation0] sm:$0x1] %vm27, %v26
    %s29 = scalar_lea.vmem %s0, 11
    %v30 = vld [vmem:[%s29] sm:$0x1]
    %31 = vrot.lane.b32.xlu0 %v30, 44
    %v32 = vpop.permute.xlu0 %31
    %vm33 = vcmask 392544
    %34 = vst.msk [vmem:[#allocation0] sm:$0x1] %vm33, %v32
    %s35 = scalar_lea.vmem %s0, 10
    %v36 = vld [vmem:[%s35] sm:$0x1]
    %37 = vrot.lane.b32.xlu0 %v36, 40
    %v38 = vpop.permute.xlu0 %37
    %vm39 = vcmask 359744
    %40 = vst.msk [vmem:[#allocation0] sm:$0x1] %vm39, %v38
    %s41 = scalar_lea.vmem %s0, 9
    %v42 = vld [vmem:[%s41] sm:$0x1]
    %43 = vrot.lane.b32.xlu0 %v42, 36
    %v44 = vpop.permute.xlu0 %43
    %vm45 = vcmask 326944
    %46 = vst.msk [vmem:[#allocation0] sm:$0x1] %vm45, %v44
    %s47 = scalar_lea.vmem %s0, 8
    %v48 = vld [vmem:[%s47] sm:$0x1]
    %49 = vrot.lane.b32.xlu0 %v48, 32
    %v50 = vpop.permute.xlu0 %49
    %vm51 = vcmask 294144
    %52 = vst.msk [vmem:[#allocation0] sm:$0x1] %vm51, %v50
    %s53 = scalar_lea.vmem %s0, 7
    %v54 = vld [vmem:[%s53] sm:$0x1]
    %55 = vrot.lane.b32.xlu0 %v54, 28
    %v56 = vpop.permute.xlu0 %55
    %vm57 = vcmask 261344
    %58 = vst.msk [vmem:[#allocation0] sm:$0x1] %vm57, %v56
    %s59 = scalar_lea.vmem %s0, 6
    %v60 = vld [vmem:[%s59] sm:$0x1]
    %61 = vrot.lane.b32.xlu0 %v60, 24
    %v62 = vpop.permute.xlu0 %61
    %vm63 = vcmask 228544
    %64 = vst.msk [vmem:[#allocation0] sm:$0x1] %vm63, %v62
    %s65 = scalar_lea.vmem %s0, 5
    %v66 = vld [vmem:[%s65] sm:$0x1]
    %67 = vrot.lane.b32.xlu0 %v66, 20
    %v68 = vpop.permute.xlu0 %67
    %vm69 = vcmask 195744
    %70 = vst.msk [vmem:[#allocation0] sm:$0x1] %vm69, %v68
    %s71 = scalar_lea.vmem %s0, 4
    %v72 = vld [vmem:[%s71] sm:$0x1]
    %73 = vrot.lane.b32.xlu0 %v72, 16
    %v74 = vpop.permute.xlu0 %73
    %vm75 = vcmask 162944
    %76 = vst.msk [vmem:[#allocation0] sm:$0x1] %vm75, %v74
    %s77 = scalar_lea.vmem %s0, 3
    %v78 = vld [vmem:[%s77] sm:$0x1]
    %79 = vrot.lane.b32.xlu0 %v78, 12
    %v80 = vpop.permute.xlu0 %79
    %vm81 = vcmask 130144
    %82 = vst.msk [vmem:[#allocation0] sm:$0x1] %vm81, %v80
    %s83 = scalar_lea.vmem %s0, 2
    %v84 = vld [vmem:[%s83] sm:$0x1]
    %85 = vrot.lane.b32.xlu0 %v84, 8
    %v86 = vpop.permute.xlu0 %85
    %vm87 = vcmask 97344
    %88 = vst.msk [vmem:[#allocation0] sm:$0x1] %vm87, %v86
    %s89 = scalar_lea.vmem %s0, 1
    %v90 = vld [vmem:[%s89] sm:$0x1]
    %91 = vrot.lane.b32.xlu0 %v90, 4
    %v92 = vpop.permute.xlu0 %91
    %vm93 = vcmask 64544
    %94 = vst.msk [vmem:[#allocation0] sm:$0x1] %vm93, %v92
    %s96 = sshll.u32 1, 1
    %s97 = ssub.s32 %s96, 1
    %v99 = vld [vmem:[#allocation0] sm:%s97]
    %s100 = sshll.u32 1, 1
    %s101 = ssub.s32 %s100, 1
    %102 = vst [vmem:[%s1] sm:%s101] %v99

// kernel: tile.36
$region0: #{tile.36}
  #allocation0 [shape = 's32[1]{0}', space=sflag, size = 0x4, scoped, tag = 'scoped memory for tile.36']
  %s0 = inlined_call_operand.vmem [shape: f32[8], index: 0, kind: input, shape index: {}]
  %s1 = inlined_call_operand.vmem [shape: f32[16,8], index: 1, kind: output, shape index: {}]
  // Predicated region
  $region2: #{tile.36} parent=0 // pred_check
    _
  $region3: #{tile.36} parent=0 // pred_check_branch
    %3 = sbr.rel (0) target = $region5
  $region4: #{tile.36} parent=0 // pred_region
    _
  $region5: #{tile.36} parent=0 // pred_fallthru
    _
  %v4 = vld [vmem:[%s0] ss:$0 sm:$0xff]
  %5 = vst [vmem:[%s1] sm:$0xff] %v4
  %s6 = scalar_lea.vmem %s1, 8
  %7 = vst [vmem:[%s6] sm:$0xff] %v4

// kernel: tile.38
$region0: #{tile.38}
  %s0 = inlined_call_operand.vmem [shape: f32[16,8], index: 0, kind: input, shape index: {}]
  %s1 = inlined_call_operand.vmem [shape: f32[1,128], index: 1, kind: output, shape index: {}]
  $region1: #{tile.38} parent=0
    #allocation0 [shape = 'u8[4096]{0}', space=vmem, size = 0x1000, scoped, tag = 'scoped mem for output reshape']
    %v2 = vld [vmem:[%s0] sm:$0x1]
    %vm3 = vcmask 64512
    %4 = vst.msk [vmem:[#allocation0] sm:$0x1] %vm3, %v2
    %s5 = scalar_lea.vmem %s0, 15
    %v6 = vld [vmem:[%s5] sm:$0x1]
    %7 = vrot.lane.b32.xlu0 %v6, 120
    %v8 = vpop.permute.xlu0 %7
    %vm9 = vcmask 1048512
    %10 = vst.msk [vmem:[#allocation0] sm:$0x1] %vm9, %v8
    %s11 = scalar_lea.vmem %s0, 14
    %v12 = vld [vmem:[%s11] sm:$0x1]
    %13 = vrot.lane.b32.xlu0 %v12, 112
    %v14 = vpop.permute.xlu0 %13
    %vm15 = vcmask 982912
    %16 = vst.msk [vmem:[#allocation0] sm:$0x1] %vm15, %v14
    %s17 = scalar_lea.vmem %s0, 13
    %v18 = vld [vmem:[%s17] sm:$0x1]
    %19 = vrot.lane.b32.xlu0 %v18, 104
    %v20 = vpop.permute.xlu0 %19
    %vm21 = vcmask 917312
    %22 = vst.msk [vmem:[#allocation0] sm:$0x1] %vm21, %v20
    %s23 = scalar_lea.vmem %s0, 12
    %v24 = vld [vmem:[%s23] sm:$0x1]
    %25 = vrot.lane.b32.xlu0 %v24, 96
    %v26 = vpop.permute.xlu0 %25
    %vm27 = vcmask 851712
    %28 = vst.msk [vmem:[#allocation0] sm:$0x1] %vm27, %v26
    %s29 = scalar_lea.vmem %s0, 11
    %v30 = vld [vmem:[%s29] sm:$0x1]
    %31 = vrot.lane.b32.xlu0 %v30, 88
    %v32 = vpop.permute.xlu0 %31
    %vm33 = vcmask 786112
    %34 = vst.msk [vmem:[#allocation0] sm:$0x1] %vm33, %v32
    %s35 = scalar_lea.vmem %s0, 10
    %v36 = vld [vmem:[%s35] sm:$0x1]
    %37 = vrot.lane.b32.xlu0 %v36, 80
    %v38 = vpop.permute.xlu0 %37
    %vm39 = vcmask 720512
    %40 = vst.msk [vmem:[#allocation0] sm:$0x1] %vm39, %v38
    %s41 = scalar_lea.vmem %s0, 9
    %v42 = vld [vmem:[%s41] sm:$0x1]
    %43 = vrot.lane.b32.xlu0 %v42, 72
    %v44 = vpop.permute.xlu0 %43
    %vm45 = vcmask 654912
    %46 = vst.msk [vmem:[#allocation0] sm:$0x1] %vm45, %v44
    %s47 = scalar_lea.vmem %s0, 8
    %v48 = vld [vmem:[%s47] sm:$0x1]
    %49 = vrot.lane.b32.xlu0 %v48, 64
    %v50 = vpop.permute.xlu0 %49
    %vm51 = vcmask 589312
    %52 = vst.msk [vmem:[#allocation0] sm:$0x1] %vm51, %v50
    %s53 = scalar_lea.vmem %s0, 7
    %v54 = vld [vmem:[%s53] sm:$0x1]
    %55 = vrot.lane.b32.xlu0 %v54, 56
    %v56 = vpop.permute.xlu0 %55
    %vm57 = vcmask 523712
    %58 = vst.msk [vmem:[#allocation0] sm:$0x1] %vm57, %v56
    %s59 = scalar_lea.vmem %s0, 6
    %v60 = vld [vmem:[%s59] sm:$0x1]
    %61 = vrot.lane.b32.xlu0 %v60, 48
    %v62 = vpop.permute.xlu0 %61
    %vm63 = vcmask 458112
    %64 = vst.msk [vmem:[#allocation0] sm:$0x1] %vm63, %v62
    %s65 = scalar_lea.vmem %s0, 5
    %v66 = vld [vmem:[%s65] sm:$0x1]
    %67 = vrot.lane.b32.xlu0 %v66, 40
    %v68 = vpop.permute.xlu0 %67
    %vm69 = vcmask 392512
    %70 = vst.msk [vmem:[#allocation0] sm:$0x1] %vm69, %v68
    %s71 = scalar_lea.vmem %s0, 4
    %v72 = vld [vmem:[%s71] sm:$0x1]
    %73 = vrot.lane.b32.xlu0 %v72, 32
    %v74 = vpop.permute.xlu0 %73
    %vm75 = vcmask 326912
    %76 = vst.msk [vmem:[#allocation0] sm:$0x1] %vm75, %v74
    %s77 = scalar_lea.vmem %s0, 3
    %v78 = vld [vmem:[%s77] sm:$0x1]
    %79 = vrot.lane.b32.xlu0 %v78, 24
    %v80 = vpop.permute.xlu0 %79
    %vm81 = vcmask 261312
    %82 = vst.msk [vmem:[#allocation0] sm:$0x1] %vm81, %v80
    %s83 = scalar_lea.vmem %s0, 2
    %v84 = vld [vmem:[%s83] sm:$0x1]
    %85 = vrot.lane.b32.xlu0 %v84, 16
    %v86 = vpop.permute.xlu0 %85
    %vm87 = vcmask 195712
    %88 = vst.msk [vmem:[#allocation0] sm:$0x1] %vm87, %v86
    %s89 = scalar_lea.vmem %s0, 1
    %v90 = vld [vmem:[%s89] sm:$0x1]
    %91 = vrot.lane.b32.xlu0 %v90, 8
    %v92 = vpop.permute.xlu0 %91
    %vm93 = vcmask 130112
    %94 = vst.msk [vmem:[#allocation0] sm:$0x1] %vm93, %v92
    %s96 = sshll.u32 1, 1
    %s97 = ssub.s32 %s96, 1
    %v99 = vld [vmem:[#allocation0] sm:%s97]
    %s100 = sshll.u32 1, 1
    %s101 = ssub.s32 %s100, 1
    %102 = vst [vmem:[%s1] sm:%s101] %v99

// kernel: depth_bottleneck_uni.1
$region0: #{depth_bottleneck_uni.1}
  #allocation0 [shape = 'u32[]', space=smem, size = 0x4, offset = 0x4, fixed_abs, tag = 'smem constant byte address 0x4 - core index']
  #allocation1 [shape = 'u32[144,128]{1,0:T(1,128)}', space=vmem, size = 0x12000, scoped, tag = 'internal scratch']
  %s0 = inlined_call_operand.vmem [shape: f32[2,20,80], index: 0, kind: input, shape index: {}]
  %s1 = inlined_call_operand.vmem [shape: f32[80,80], index: 1, kind: input, shape index: {}]
  %s2 = inlined_call_operand.vmem [shape: f32[1,80], index: 2, kind: input, shape index: {}]
  %s3 = inlined_call_operand.vmem [shape: f32[25,16,64], index: 3, kind: input, shape index: {}]
  %s4 = inlined_call_operand.vmem [shape: f32[1,64], index: 4, kind: input, shape index: {}]
  %s5 = inlined_call_operand.vmem [shape: f32[64,128], index: 5, kind: input, shape index: {}]
  %s6 = inlined_call_operand.vmem [shape: f32[1,128], index: 6, kind: input, shape index: {}]
  %s7 = inlined_call_operand.vmem [shape: f32[2,16,128], index: 7, kind: output, shape index: {}]
  %s8 = sld [smem:[#allocation0]]
  $region61: #{depth_bottleneck_uni.1} parent=0
    _
  %s10 = ssub.s32 1, %s8
  %s11 = scalar_select 0, %s10, %s8
  loop: start=0, step=1, limit=4
  $region2: #{depth_bottleneck_uni.1} parent=0 // loop_pre_header
    _
  $region3: #{depth_bottleneck_uni.1} parent=0 // loop_header
    %s13 = sphi 0, %s17
    %p14 = scmp.ge.s32.totalorder %s13, 4
    %s20 = sphi 0, %s32
    %s21 = sphi 0, %s28
    %s22 = sphi 0, %s20
    %s23 = sphi 0, %s21
    %s24 = sphi 0, %s22
    %s25 = sphi 0, %s23
    %s35 = sphi 0, %s37
    %s38 = sphi 0, %s35
    %s39 = sphi 0, %s38
    %s55 = sphi 0, %s39
    %s59 = sphi 0, %s59
    %s61 = sphi 0, %s59
    %s62 = sphi 0, %s61
    %s76 = sphi 0, %s62
    %s80 = sphi 0, %s80
    %s82 = sphi 0, %s80
    %s83 = sphi 0, %s82
    %s97 = sphi 0, %s83
    %s101 = sphi 0, %s101
    %s103 = sphi 0, %s101
    %s104 = sphi 0, %s103
    %s118 = sphi 0, %s104
    %s122 = sphi 0, %s122
    %s124 = sphi 0, %s122
    %s125 = sphi 0, %s124
    %s139 = sphi 0, %s125
    %s143 = sphi 0, %s143
    %s145 = sphi 0, %s143
    %s146 = sphi 0, %s145
    %s160 = sphi 0, %s146
    %s164 = sphi 0, %s164
    %s166 = sphi 0, %s164
    %s167 = sphi 0, %s166
    %s181 = sphi 0, %s167
    %s189 = sphi 0, %s191
    %s192 = sphi 0, %s189
    %s193 = sphi 0, %s192
    %s209 = sphi 0, %s193
  $region4: #{depth_bottleneck_uni.1} parent=0 // loop_header_branch
    %16 = sbr.rel (%p14) target = $region8
  $region5: #{depth_bottleneck_uni.1} parent=0 // loop_body
    %s18 = ssub.s32 %s13, 1
    %s19 = ssub.s32 %s13, 2
    %s26 = sadd.s32 1, %s21
    %p27 = scmp.ge.s32.totalorder %s26, 1
    %s28 = scalar_select %p27, 0, %s26
    %s29 = sadd.s32 1, %s20
    %s30 = scalar_select %p27, %s29, %s20
    %p31 = scmp.ge.s32.totalorder %s30, 2
    %s32 = scalar_select %p31, 0, %s30
    %s33 = ssub.s32 %s20, %s32
    %p34 = scmp.eq.s32.totalorder %s33, 0
    %s36 = sadd.s32 %s35, 1
    %s37 = scalar_select %p34, %s35, %s36
    %p40 = pneg %p34
    %p41 = scmp.eq.s32.totalorder %s13, 1
    %p42 = por %p40, %p41
    %p43 = scmp.ne.s32.totalorder %s35, %s38
    %p44 = scmp.eq.s32.totalorder %s13, 0
    %p45 = por %p43, %p44
    %p46 = scmp.ne.s32.totalorder %s35, %s38
    %p47 = scmp.eq.s32.totalorder %s18, 1
    %p48 = por %p46, %p47
    %p49 = scmp.ne.s32.totalorder %s38, %s39
    %p50 = scmp.eq.s32.totalorder %s18, 0
    %p51 = por %p49, %p50
    %p52 = scmp.ne.s32.totalorder %s38, %s39
    %p53 = scmp.eq.s32.totalorder %s19, 1
    %p54 = por %p52, %p53
    %p56 = scmp.ne.s32.totalorder %s39, %s55
    %p57 = scmp.eq.s32.totalorder %s19, 0
    %p58 = por %p56, %p57
    %s60 = sadd.s32 %s59, 1
    %p63 = scmp.eq.s32.totalorder %s13, 1
    %p64 = scmp.ne.s32.totalorder %s59, %s61
    %p65 = scmp.eq.s32.totalorder %s13, 0
    %p66 = por %p64, %p65
    %p67 = scmp.ne.s32.totalorder %s59, %s61
    %p68 = scmp.eq.s32.totalorder %s18, 1
    %p69 = por %p67, %p68
    %p70 = scmp.ne.s32.totalorder %s61, %s62
    %p71 = scmp.eq.s32.totalorder %s18, 0
    %p72 = por %p70, %p71
    %p73 = scmp.ne.s32.totalorder %s61, %s62
    %p74 = scmp.eq.s32.totalorder %s19, 1
    %p75 = por %p73, %p74
    %p77 = scmp.ne.s32.totalorder %s62, %s76
    %p78 = scmp.eq.s32.totalorder %s19, 0
    %p79 = por %p77, %p78
    %s81 = sadd.s32 %s80, 1
    %p84 = scmp.eq.s32.totalorder %s13, 1
    %p85 = scmp.ne.s32.totalorder %s80, %s82
    %p86 = scmp.eq.s32.totalorder %s13, 0
    %p87 = por %p85, %p86
    %p88 = scmp.ne.s32.totalorder %s80, %s82
    %p89 = scmp.eq.s32.totalorder %s18, 1
    %p90 = por %p88, %p89
    %p91 = scmp.ne.s32.totalorder %s82, %s83
    %p92 = scmp.eq.s32.totalorder %s18, 0
    %p93 = por %p91, %p92
    %p94 = scmp.ne.s32.totalorder %s82, %s83
    %p95 = scmp.eq.s32.totalorder %s19, 1
    %p96 = por %p94, %p95
    %p98 = scmp.ne.s32.totalorder %s83, %s97
    %p99 = scmp.eq.s32.totalorder %s19, 0
    %p100 = por %p98, %p99
    %s102 = sadd.s32 %s101, 1
    %p105 = scmp.eq.s32.totalorder %s13, 1
    %p106 = scmp.ne.s32.totalorder %s101, %s103
    %p107 = scmp.eq.s32.totalorder %s13, 0
    %p108 = por %p106, %p107
    %p109 = scmp.ne.s32.totalorder %s101, %s103
    %p110 = scmp.eq.s32.totalorder %s18, 1
    %p111 = por %p109, %p110
    %p112 = scmp.ne.s32.totalorder %s103, %s104
    %p113 = scmp.eq.s32.totalorder %s18, 0
    %p114 = por %p112, %p113
    %p115 = scmp.ne.s32.totalorder %s103, %s104
    %p116 = scmp.eq.s32.totalorder %s19, 1
    %p117 = por %p115, %p116
    %p119 = scmp.ne.s32.totalorder %s104, %s118
    %p120 = scmp.eq.s32.totalorder %s19, 0
    %p121 = por %p119, %p120
    %s123 = sadd.s32 %s122, 1
    %p126 = scmp.eq.s32.totalorder %s13, 1
    %p127 = scmp.ne.s32.totalorder %s122, %s124
    %p128 = scmp.eq.s32.totalorder %s13, 0
    %p129 = por %p127, %p128
    %p130 = scmp.ne.s32.totalorder %s122, %s124
    %p131 = scmp.eq.s32.totalorder %s18, 1
    %p132 = por %p130, %p131
    %p133 = scmp.ne.s32.totalorder %s124, %s125
    %p134 = scmp.eq.s32.totalorder %s18, 0
    %p135 = por %p133, %p134
    %p136 = scmp.ne.s32.totalorder %s124, %s125
    %p137 = scmp.eq.s32.totalorder %s19, 1
    %p138 = por %p136, %p137
    %p140 = scmp.ne.s32.totalorder %s125, %s139
    %p141 = scmp.eq.s32.totalorder %s19, 0
    %p142 = por %p140, %p141
    %s144 = sadd.s32 %s143, 1
    %p147 = scmp.eq.s32.totalorder %s13, 1
    %p148 = scmp.ne.s32.totalorder %s143, %s145
    %p149 = scmp.eq.s32.totalorder %s13, 0
    %p150 = por %p148, %p149
    %p151 = scmp.ne.s32.totalorder %s143, %s145
    %p152 = scmp.eq.s32.totalorder %s18, 1
    %p153 = por %p151, %p152
    %p154 = scmp.ne.s32.totalorder %s145, %s146
    %p155 = scmp.eq.s32.totalorder %s18, 0
    %p156 = por %p154, %p155
    %p157 = scmp.ne.s32.totalorder %s145, %s146
    %p158 = scmp.eq.s32.totalorder %s19, 1
    %p159 = por %p157, %p158
    %p161 = scmp.ne.s32.totalorder %s146, %s160
    %p162 = scmp.eq.s32.totalorder %s19, 0
    %p163 = por %p161, %p162
    %s165 = sadd.s32 %s164, 1
    %p168 = scmp.eq.s32.totalorder %s13, 1
    %p169 = scmp.ne.s32.totalorder %s164, %s166
    %p170 = scmp.eq.s32.totalorder %s13, 0
    %p171 = por %p169, %p170
    %p172 = scmp.ne.s32.totalorder %s164, %s166
    %p173 = scmp.eq.s32.totalorder %s18, 1
    %p174 = por %p172, %p173
    %p175 = scmp.ne.s32.totalorder %s166, %s167
    %p176 = scmp.eq.s32.totalorder %s18, 0
    %p177 = por %p175, %p176
    %p178 = scmp.ne.s32.totalorder %s166, %s167
    %p179 = scmp.eq.s32.totalorder %s19, 1
    %p180 = por %p178, %p179
    %p182 = scmp.ne.s32.totalorder %s167, %s181
    %p183 = scmp.eq.s32.totalorder %s19, 0
    %p184 = por %p182, %p183
    %s185 = ssub.s32 %s20, %s32
    %s186 = ssub.s32 %s21, %s28
    %s187 = sor.u32 %s185, %s186
    %p188 = scmp.eq.s32.totalorder %s187, 0
    %s190 = sadd.s32 %s189, 1
    %s191 = scalar_select %p188, %s189, %s190
    %p194 = pneg %p188
    %p195 = scmp.eq.s32.totalorder %s13, 1
    %p196 = por %p194, %p195
    %p197 = scmp.ne.s32.totalorder %s189, %s192
    %p198 = scmp.eq.s32.totalorder %s13, 0
    %p199 = por %p197, %p198
    %p200 = scmp.ne.s32.totalorder %s189, %s192
    %p201 = scmp.eq.s32.totalorder %s18, 1
    %p202 = por %p200, %p201
    %p203 = scmp.ne.s32.totalorder %s192, %s193
    %p204 = scmp.eq.s32.totalorder %s18, 0
    %p205 = por %p203, %p204
    %p206 = scmp.ne.s32.totalorder %s192, %s193
    %p207 = scmp.eq.s32.totalorder %s19, 1
    %p208 = por %p206, %p207
    %p210 = scmp.ne.s32.totalorder %s193, %s209
    %p211 = scmp.eq.s32.totalorder %s19, 0
    %p212 = por %p210, %p211
    %p213 = scmp.le.s32.totalorder 1, %s13
    %p214 = scmp.lt.s32.totalorder %s13, 3
    %p215 = pnand %p213, %p214
    %p216 = pneg %p215
    // Predicated region
    $region9: #{depth_bottleneck_uni.1} parent=5 // pred_check
      _
    $region10: #{depth_bottleneck_uni.1} parent=5 // pred_check_branch
      %218 = sbr.rel (%p215) target = $region12
    $region11: #{depth_bottleneck_uni.1} parent=5 // pred_region
      %s219 = ssub.s32 %s13, 1
      // Predicated region
      $region13: #{depth_bottleneck_uni.1} parent=11 // pred_check
        %p220 = pneg %p72
      $region14: #{depth_bottleneck_uni.1} parent=11 // pred_check_branch
        %222 = sbr.rel (%p220) target = $region16
      $region15: #{depth_bottleneck_uni.1} parent=11 // pred_region
        _
      $region16: #{depth_bottleneck_uni.1} parent=11 // pred_fallthru
        _
      // Predicated region
      $region17: #{depth_bottleneck_uni.1} parent=11 // pred_check
        %p223 = pneg %p93
      $region18: #{depth_bottleneck_uni.1} parent=11 // pred_check_branch
        %225 = sbr.rel (%p223) target = $region20
      $region19: #{depth_bottleneck_uni.1} parent=11 // pred_region
        _
      $region20: #{depth_bottleneck_uni.1} parent=11 // pred_fallthru
        _
      // Predicated region
      $region21: #{depth_bottleneck_uni.1} parent=11 // pred_check
        %p226 = pneg %p114
      $region22: #{depth_bottleneck_uni.1} parent=11 // pred_check_branch
        %228 = sbr.rel (%p226) target = $region24
      $region23: #{depth_bottleneck_uni.1} parent=11 // pred_region
        _
      $region24: #{depth_bottleneck_uni.1} parent=11 // pred_fallthru
        _
      // Predicated region
      $region25: #{depth_bottleneck_uni.1} parent=11 // pred_check
        %p229 = pneg %p135
      $region26: #{depth_bottleneck_uni.1} parent=11 // pred_check_branch
        %231 = sbr.rel (%p229) target = $region28
      $region27: #{depth_bottleneck_uni.1} parent=11 // pred_region
        _
      $region28: #{depth_bottleneck_uni.1} parent=11 // pred_fallthru
        _
      // Predicated region
      $region29: #{depth_bottleneck_uni.1} parent=11 // pred_check
        %p232 = pneg %p156
      $region30: #{depth_bottleneck_uni.1} parent=11 // pred_check_branch
        %234 = sbr.rel (%p232) target = $region32
      $region31: #{depth_bottleneck_uni.1} parent=11 // pred_region
        _
      $region32: #{depth_bottleneck_uni.1} parent=11 // pred_fallthru
        _
      // Predicated region
      $region33: #{depth_bottleneck_uni.1} parent=11 // pred_check
        %p235 = pneg %p177
      $region34: #{depth_bottleneck_uni.1} parent=11 // pred_check_branch
        %237 = sbr.rel (%p235) target = $region36
      $region35: #{depth_bottleneck_uni.1} parent=11 // pred_region
        _
      $region36: #{depth_bottleneck_uni.1} parent=11 // pred_fallthru
        _
    $region12: #{depth_bottleneck_uni.1} parent=5 // pred_fallthru
      _
    %p238 = scmp.lt.s32.totalorder %s13, 2
    // Predicated region
    $region37: #{depth_bottleneck_uni.1} parent=5 // pred_check
      %p239 = pneg %p238
    $region38: #{depth_bottleneck_uni.1} parent=5 // pred_check_branch
      %241 = sbr.rel (%p239) target = $region40
    $region39: #{depth_bottleneck_uni.1} parent=5 // pred_region
      // Predicated region
      $region41: #{depth_bottleneck_uni.1} parent=39 // pred_check
        %p242 = pneg %p45
      $region42: #{depth_bottleneck_uni.1} parent=39 // pred_check_branch
        %244 = sbr.rel (%p242) target = $region44
      $region43: #{depth_bottleneck_uni.1} parent=39 // pred_region
        %p245 = scmp.lt.s32.totalorder %s20, 1
        %s246 = scalar_select %p245, %s20, 1
        %s247 = smul.addr %s246, 3
        %s248 = smul.addr %s247, 8
        %s249 = scalar_lea.vmem %s0, %s248
      $region44: #{depth_bottleneck_uni.1} parent=39 // pred_fallthru
        _
    $region40: #{depth_bottleneck_uni.1} parent=5 // pred_fallthru
      _
    %p250 = scmp.le.s32.totalorder 1, %s13
    %p251 = scmp.lt.s32.totalorder %s13, 3
    %p252 = pnand %p250, %p251
    %p253 = pneg %p252
    // Predicated region
    $region45: #{depth_bottleneck_uni.1} parent=5 // pred_check
      _
    $region46: #{depth_bottleneck_uni.1} parent=5 // pred_check_branch
      %255 = sbr.rel (%p252) target = $region48
    $region47: #{depth_bottleneck_uni.1} parent=5 // pred_region
      %s256 = ssub.s32 %s13, 1
      %p257 = scmp.lt.s32.totalorder %s22, 1
      %s258 = scalar_select %p257, %s22, 1
      %s259 = smul.addr %s258, 3
      %s260 = smul.addr %s259, 8
      %s261 = scalar_lea.vmem %s0, %s260
      %p262 = pneg %p51
      %p263 = pneg %p48
      %p264 = pneg %p72
      %p265 = pneg %p69
      %p266 = pneg %p93
      %p267 = pneg %p90
      %p268 = pneg %p114
      %p269 = pneg %p111
      %p270 = pneg %p135
      %p271 = pneg %p132
      %p272 = pneg %p156
      %p273 = pneg %p153
      %p274 = pneg %p177
      %p275 = pneg %p174
      %p276 = pneg %p205
      %p277 = pneg %p202
      %s278 = smul.u32 2, %s23
      %p279 = scmp.lt.s32.totalorder %s22, 1
      %s280 = scalar_select %p279, %s22, 1
      %p281 = scmp.lt.s32.totalorder %s278, 1
      %s282 = scalar_select %p281, %s278, 1
      %s283 = smul.addr %s280, 2
      %s284 = sadd.s32 %s282, %s283
      %s285 = smul.addr %s284, 8
      %s286 = scalar_lea.vmem %s7, %s285
      %p287 = scmp.lt.s32.totalorder %s22, 1
      %s288 = scalar_select %p287, %s22, 1
      %s289 = smul.addr %s288, 3
      %s290 = smul.addr %s289, 8
      %s291 = scalar_lea.vmem %s0, %s290
      %s292 = smul.u32 2, %s23
      %p293 = scmp.lt.s32.totalorder %s22, 1
      %s294 = scalar_select %p293, %s22, 1
      %p295 = scmp.lt.s32.totalorder %s292, 1
      %s296 = scalar_select %p295, %s292, 1
      %s297 = smul.addr %s294, 2
      %s298 = sadd.s32 %s296, %s297
      %s299 = smul.addr %s298, 8
      %s300 = scalar_lea.vmem %s7, %s299
      %s301 = smul.u32 2, %s23
      %s302 = smul.u32 %s23, 16
      %s303 = scalar_lea.vmem %s291, %s302
      %v304 = vld [vmem:[%s303] sm:$0xff]
      %v305 = vld [vmem:[%s303 + $0x8] sm:$0xff]
      %v306 = vld [vmem:[%s303 + $0x10] sm:$0xf]
      %v307 = vld [vmem:[%s1] sm:$0xff]
      %v308 = vld [vmem:[%s1 + $0x8] sm:$0xff]
      %v309 = vld [vmem:[%s1 + $0x10] sm:$0xff]
      %v310 = vld [vmem:[%s1 + $0x18] sm:$0xff]
      %v311 = vld [vmem:[%s1 + $0x20] sm:$0xff]
      %v312 = vld [vmem:[%s1 + $0x28] sm:$0xff]
      %v313 = vld [vmem:[%s1 + $0x30] sm:$0xff]
      %v314 = vld [vmem:[%s1 + $0x38] sm:$0xff]
      %v315 = vld [vmem:[%s1 + $0x40] sm:$0xff]
      %v316 = vld [vmem:[%s1 + $0x48] sm:$0xff]
      %v317 = vld [vmem:[%s2] sm:$0x1]
      %v319 = vlaneseq
      %v320 = vshrl.u32 %v319, 7
      %v321 = vsub.s32 0, %v320
      %v322 = vrot.slane %v317, %v321
      %vm324 = vcmask 654336
      %v326 = vsel %vm324, %v304, 0
      %v329 = vsel %vm324, %v305, 0
      %v332 = vsel %vm324, %v306, 0
      %334 = vmatprep.subr.mxu0 0.0
      %335 = vmatpush1.msra.mxu0 0.0
      %336 = vmatprep.subr.mxu0 0.0
      %337 = vmatpush1.msra.mxu0 0.0
      %338 = vmatprep.subr.mxu0 0.0
      %339 = vmatpush1.msra.mxu0 0.0
      %340 = vmatprep.subr.mxu0 0.0
      %341 = vmatpush1.msra.mxu0 0.0
      %342 = vmatprep.subr.mxu0 0.0
      %343 = vmatpush1.msra.mxu0 0.0
      %344 = vmatprep.subr.mxu0 0.0
      %345 = vmatpush1.msra.mxu0 0.0
      %346 = vmatprep.subr.mxu0 0.0
      %347 = vmatpush1.msra.mxu0 %v316
      %348 = vmatprep.subr.mxu0 0.0
      %349 = vmatpush1.msra.mxu0 %v315
      %350 = vmatprep.subr.mxu0 0.0
      %351 = vmatpush1.msra.mxu0 %v314
      %352 = vmatprep.subr.mxu0 0.0
      %353 = vmatpush1.msra.mxu0 %v313
      %354 = vmatprep.subr.mxu0 0.0
      %355 = vmatpush1.msra.mxu0 %v312
      %356 = vmatprep.subr.mxu0 0.0
      %357 = vmatpush1.msra.mxu0 %v311
      %358 = vmatprep.subr.mxu0 0.0
      %359 = vmatpush1.msra.mxu0 %v310
      %360 = vmatprep.subr.mxu0 0.0
      %361 = vmatpush1.msra.mxu0 %v309
      %362 = vmatprep.subr.mxu0 0.0
      %363 = vmatpush1.msra.mxu0 %v308
      %364 = vmatprep.subr.mxu0 0.0
      %365 = vmatpush1.msra.mxu0 %v307
      %366 = vmatprep.subr.mxu0 0.0
      %367 = vmatpush2.msra.mxu0 0.0
      %368 = vmatprep.subr.mxu0 0.0
      %369 = vmatpush2.msra.mxu0 0.0
      %370 = vmatprep.subr.mxu0 0.0
      %371 = vmatpush2.msra.mxu0 0.0
      %372 = vmatprep.subr.mxu0 0.0
      %373 = vmatpush2.msra.mxu0 0.0
      %374 = vmatprep.subr.mxu0 0.0
      %375 = vmatpush2.msra.mxu0 0.0
      %376 = vmatprep.subr.mxu0 0.0
      %377 = vmatpush2.msra.mxu0 0.0
      %378 = vmatprep.subr.mxu0 0.0
      %379 = vmatpush2.msra.mxu0 0.0
      %380 = vmatprep.subr.mxu0 0.0
      %381 = vmatpush2.msra.mxu0 0.0
      %382 = vmatprep.subr.mxu0 0.0
      %383 = vmatpush2.msra.mxu0 0.0
      %384 = vmatprep.subr.mxu0 0.0
      %385 = vmatpush2.msra.mxu0 0.0
      %386 = vmatprep.subr.mxu0 0.0
      %387 = vmatpush2.msra.mxu0 0.0
      %388 = vmatprep.subr.mxu0 0.0
      %389 = vmatpush2.msra.mxu0 0.0
      %390 = vmatprep.subr.mxu0 0.0
      %391 = vmatpush2.msra.mxu0 0.0
      %392 = vmatprep.subr.mxu0 0.0
      %393 = vmatpush2.msra.mxu0 0.0
      %394 = vmatprep.subr.mxu0 0.0
      %395 = vmatpush2.msra.mxu0 0.0
      %396 = vmatprep.subr.mxu0 0.0
      %397 = vmatpush2.msra.mxu0 0.0
      %398 = vmatprep.mubr.f32.mxu0 0.0
      %399 = vmatmul.mubr.f32.gmra.mxu0 %v326
      %v400 = vpop.f32.mrf.mxu0
      %v401 = vadd.f32 %v322, %v400
      %v402 = vpop.f32.mrf.mxu0
      %403 = vmatprep.mubr.f32.mxu0 0.0
      %404 = vmatmul.mubr.f32.gmra.mxu0 %v329
      %v405 = vpop.f32.mrf.mxu0
      %v406 = vadd.f32 %v322, %v405
      %v407 = vpop.f32.mrf.mxu0
      %408 = vmatprep.mubr.f32.mxu0 0.0
      %409 = vmatmul.mubr.f32.gmra.mxu0 %v332
      %v410 = vpop.f32.mrf.mxu0
      %v411 = vadd.f32 %v322, %v410
      %v412 = vpop.f32.mrf.mxu0
      %413 = vdwg.mxu0
      %v414 = vlaneseq
      %v415 = vshrl.u32 %v414, 7
      %v416 = vadd.s32 %v415, 8
      %v417 = vadd.s32 %v415, 16
      %v418 = vstv %s302
      %v419 = vadd.s32 %v418, %v415
      %v420 = vadd.s32 %v418, %v416
      %v421 = vadd.s32 %v418, %v417
      %vm422 = vcmp.ge.s32.totalorder %v419, 2
      %vm423 = vcmp.ge.s32.totalorder %v420, 2
      %vm424 = vcmp.ge.s32.totalorder %v421, 2
      %vm425 = vcmp.lt.s32.totalorder %v419, 18
      %vm426 = vcmp.lt.s32.totalorder %v420, 18
      %vm427 = vcmp.lt.s32.totalorder %v421, 18
      %vm428 = vmand %vm422, %vm425
      %vm429 = vmand %vm423, %vm426
      %vm430 = vmand %vm424, %vm427
      %v431 = vmin.f32 %v401, 20.0
      %v432 = vmin.f32 %v406, 20.0
      %v433 = vmin.f32 %v411, 20.0
      %v434 = vmul.f32 %v431, 1.442695
      %v435 = vpow.pop %v434
      %v436 = vmul.f32 %v432, 1.442695
      %v437 = vpow.pop %v436
      %v438 = vmul.f32 %v433, 1.442695
      %v439 = vpow.pop %v438
      %v440 = vadd.f32 %v435, 2.0
      %v441 = vadd.f32 %v437, 2.0
      %v442 = vadd.f32 %v439, 2.0
      %v443 = vmul.f32 %v435, %v440
      %v444 = vmul.f32 %v437, %v441
      %v445 = vmul.f32 %v439, %v442
      %v446 = vadd.f32 %v443, 2.0
      %v447 = vadd.f32 %v444, 2.0
      %v448 = vadd.f32 %v445, 2.0
      %v449 = vrcp.pop %v446
      %v450 = vmul.f32 %v443, %v449
      %v451 = vrcp.pop %v447
      %v452 = vmul.f32 %v444, %v451
      %v453 = vrcp.pop %v448
      %v454 = vmul.f32 %v445, %v453
      %v455 = vmul.f32 %v401, %v450
      %v456 = vmul.f32 %v406, %v452
      %v457 = vmul.f32 %v411, %v454
      %v458 = vsel %vm428, 1, 0
      %v459 = vsel %vm429, 1, 0
      %v460 = vsel %vm430, 1, 0
      %vm461 = vcmp.eq.s32.totalorder %v458, 1
      %vm462 = vcmp.eq.s32.totalorder %v459, 1
      %vm463 = vcmp.eq.s32.totalorder %v460, 1
      %v464 = vsel %vm461, %v455, 0.0
      %v465 = vsel %vm462, %v456, 0.0
      %v466 = vsel %vm463, %v457, 0.0
      %v467 = vld [vmem:[%s3] sm:$0xff]
      %v468 = vld [vmem:[%s3 + $0x8] sm:$0xff]
      %v469 = vmul.f32 %v464, %v467
      %v470 = vmul.f32 %v465, %v468
      %v471 = vadd.f32 %v469, 0.0
      %v472 = vadd.f32 %v470, 0.0
      %s473 = scalar_lea.vmem %s3, 80
      %v474 = vld [vmem:[%s473] sm:$0xff]
      %v475 = vld [vmem:[%s473 + $0x8] sm:$0xff]
      %vm478 = vcmask 1040384
      %v479 = vrot.slane %v474, 7
      %v480 = vrot.slane %v475, 7
      %v481 = vsel %vm478, %v479, %v480
      %v485 = vmul.f32 %v464, %v479
      %v486 = vmul.f32 %v465, %v481
      %v487 = vmul.f32 %v466, %v480
      %vm491 = vcmask 1046528
      %v492 = vrot.slane %v485, 1
      %v493 = vrot.slane %v486, 1
      %v494 = vsel %vm491, %v492, %v493
      %v495 = vrot.slane %v487, 1
      %v496 = vsel %vm491, %v493, %v495
      %v499 = vadd.f32 %v471, %v494
      %v500 = vadd.f32 %v472, %v496
      %s501 = scalar_lea.vmem %s3, 160
      %v502 = vld [vmem:[%s501] sm:$0xff]
      %v503 = vld [vmem:[%s501 + $0x8] sm:$0xff]
      %vm506 = vcmask 1041408
      %v507 = vrot.slane %v502, 6
      %v508 = vrot.slane %v503, 6
      %v509 = vsel %vm506, %v507, %v508
      %v513 = vmul.f32 %v464, %v507
      %v514 = vmul.f32 %v465, %v509
      %v515 = vmul.f32 %v466, %v508
      %vm519 = vcmask 1045504
      %v520 = vrot.slane %v513, 2
      %v521 = vrot.slane %v514, 2
      %v522 = vsel %vm519, %v520, %v521
      %v523 = vrot.slane %v515, 2
      %v524 = vsel %vm519, %v521, %v523
      %v527 = vadd.f32 %v499, %v522
      %v528 = vadd.f32 %v500, %v524
      %s529 = scalar_lea.vmem %s3, 240
      %v530 = vld [vmem:[%s529] sm:$0xff]
      %v531 = vld [vmem:[%s529 + $0x8] sm:$0xff]
      %vm534 = vcmask 1042432
      %v535 = vrot.slane %v530, 5
      %v536 = vrot.slane %v531, 5
      %v537 = vsel %vm534, %v535, %v536
      %v541 = vmul.f32 %v464, %v535
      %v542 = vmul.f32 %v465, %v537
      %v543 = vmul.f32 %v466, %v536
      %vm547 = vcmask 1044480
      %v548 = vrot.slane %v541, 3
      %v549 = vrot.slane %v542, 3
      %v550 = vsel %vm547, %v548, %v549
      %v551 = vrot.slane %v543, 3
      %v552 = vsel %vm547, %v549, %v551
      %v555 = vadd.f32 %v527, %v550
      %v556 = vadd.f32 %v528, %v552
      %s557 = scalar_lea.vmem %s3, 320
      %v558 = vld [vmem:[%s557] sm:$0xff]
      %v559 = vld [vmem:[%s557 + $0x8] sm:$0xff]
      %vm562 = vcmask 1043456
      %v563 = vrot.slane %v558, 4
      %v564 = vrot.slane %v559, 4
      %v565 = vsel %vm562, %v563, %v564
      %v569 = vmul.f32 %v464, %v563
      %v570 = vmul.f32 %v465, %v565
      %v571 = vmul.f32 %v466, %v564
      %v575 = vrot.slane %v569, 4
      %v576 = vrot.slane %v570, 4
      %v577 = vsel %vm562, %v575, %v576
      %v578 = vrot.slane %v571, 4
      %v579 = vsel %vm562, %v576, %v578
      %v582 = vadd.f32 %v555, %v577
      %v583 = vadd.f32 %v556, %v579
      %s584 = scalar_lea.vmem %s3, 16
      %v585 = vld [vmem:[%s584] sm:$0xff]
      %v586 = vld [vmem:[%s584 + $0x8] sm:$0xff]
      %589 = vrot.lane.b32.xlu0 %v585, 4
      %v590 = vpop.permute.xlu0 %589
      %591 = vrot.lane.b32.xlu0 %v586, 4
      %v592 = vpop.permute.xlu0 %591
      %v595 = vmul.f32 %v464, %v590
      %v596 = vmul.f32 %v465, %v592
      %599 = vrot.lane.b32.xlu0 %v595, 124
      %v600 = vpop.permute.xlu0 %599
      %601 = vrot.lane.b32.xlu0 %v596, 124
      %v602 = vpop.permute.xlu0 %601
      %v605 = vadd.f32 %v582, %v600
      %v606 = vadd.f32 %v583, %v602
      %s607 = scalar_lea.vmem %s3, 96
      %v608 = vld [vmem:[%s607] sm:$0xff]
      %v609 = vld [vmem:[%s607 + $0x8] sm:$0xff]
      %v612 = vrot.slane %v608, 7
      %v613 = vrot.slane %v609, 7
      %v614 = vsel %vm478, %v612, %v613
      %615 = vrot.lane.b32.xlu0 %v612, 4
      %v616 = vpop.permute.xlu0 %615
      %617 = vrot.lane.b32.xlu0 %v614, 4
      %v618 = vpop.permute.xlu0 %617
      %619 = vrot.lane.b32.xlu0 %v613, 4
      %v620 = vpop.permute.xlu0 %619
      %v624 = vmul.f32 %v464, %v616
      %v625 = vmul.f32 %v465, %v618
      %v626 = vmul.f32 %v466, %v620
      %v630 = vrot.slane %v624, 1
      %v631 = vrot.slane %v625, 1
      %v632 = vsel %vm491, %v630, %v631
      %v633 = vrot.slane %v626, 1
      %v634 = vsel %vm491, %v631, %v633
      %635 = vrot.lane.b32.xlu0 %v632, 124
      %v636 = vpop.permute.xlu0 %635
      %637 = vrot.lane.b32.xlu0 %v634, 124
      %v638 = vpop.permute.xlu0 %637
      %v641 = vadd.f32 %v605, %v636
      %v642 = vadd.f32 %v606, %v638
      %s643 = scalar_lea.vmem %s3, 176
      %v644 = vld [vmem:[%s643] sm:$0xff]
      %v645 = vld [vmem:[%s643 + $0x8] sm:$0xff]
      %v648 = vrot.slane %v644, 6
      %v649 = vrot.slane %v645, 6
      %v650 = vsel %vm506, %v648, %v649
      %651 = vrot.lane.b32.xlu0 %v648, 4
      %v652 = vpop.permute.xlu0 %651
      %653 = vrot.lane.b32.xlu0 %v650, 4
      %v654 = vpop.permute.xlu0 %653
      %655 = vrot.lane.b32.xlu0 %v649, 4
      %v656 = vpop.permute.xlu0 %655
      %v660 = vmul.f32 %v464, %v652
      %v661 = vmul.f32 %v465, %v654
      %v662 = vmul.f32 %v466, %v656
      %v666 = vrot.slane %v660, 2
      %v667 = vrot.slane %v661, 2
      %v668 = vsel %vm519, %v666, %v667
      %v669 = vrot.slane %v662, 2
      %v670 = vsel %vm519, %v667, %v669
      %671 = vrot.lane.b32.xlu0 %v668, 124
      %v672 = vpop.permute.xlu0 %671
      %673 = vrot.lane.b32.xlu0 %v670, 124
      %v674 = vpop.permute.xlu0 %673
      %v677 = vadd.f32 %v641, %v672
      %v678 = vadd.f32 %v642, %v674
      %s679 = scalar_lea.vmem %s3, 256
      %v680 = vld [vmem:[%s679] sm:$0xff]
      %v681 = vld [vmem:[%s679 + $0x8] sm:$0xff]
      %v684 = vrot.slane %v680, 5
      %v685 = vrot.slane %v681, 5
      %v686 = vsel %vm534, %v684, %v685
      %687 = vrot.lane.b32.xlu0 %v684, 4
      %v688 = vpop.permute.xlu0 %687
      %689 = vrot.lane.b32.xlu0 %v686, 4
      %v690 = vpop.permute.xlu0 %689
      %691 = vrot.lane.b32.xlu0 %v685, 4
      %v692 = vpop.permute.xlu0 %691
      %v696 = vmul.f32 %v464, %v688
      %v697 = vmul.f32 %v465, %v690
      %v698 = vmul.f32 %v466, %v692
      %v702 = vrot.slane %v696, 3
      %v703 = vrot.slane %v697, 3
      %v704 = vsel %vm547, %v702, %v703
      %v705 = vrot.slane %v698, 3
      %v706 = vsel %vm547, %v703, %v705
      %707 = vrot.lane.b32.xlu0 %v704, 124
      %v708 = vpop.permute.xlu0 %707
      %709 = vrot.lane.b32.xlu0 %v706, 124
      %v710 = vpop.permute.xlu0 %709
      %v713 = vadd.f32 %v677, %v708
      %v714 = vadd.f32 %v678, %v710
      %s715 = scalar_lea.vmem %s3, 336
      %v716 = vld [vmem:[%s715] sm:$0xff]
      %v717 = vld [vmem:[%s715 + $0x8] sm:$0xff]
      %v720 = vrot.slane %v716, 4
      %v721 = vrot.slane %v717, 4
      %v722 = vsel %vm562, %v720, %v721
      %723 = vrot.lane.b32.xlu0 %v720, 4
      %v724 = vpop.permute.xlu0 %723
      %725 = vrot.lane.b32.xlu0 %v722, 4
      %v726 = vpop.permute.xlu0 %725
      %727 = vrot.lane.b32.xlu0 %v721, 4
      %v728 = vpop.permute.xlu0 %727
      %v732 = vmul.f32 %v464, %v724
      %v733 = vmul.f32 %v465, %v726
      %v734 = vmul.f32 %v466, %v728
      %v738 = vrot.slane %v732, 4
      %v739 = vrot.slane %v733, 4
      %v740 = vsel %vm562, %v738, %v739
      %v741 = vrot.slane %v734, 4
      %v742 = vsel %vm562, %v739, %v741
      %743 = vrot.lane.b32.xlu0 %v740, 124
      %v744 = vpop.permute.xlu0 %743
      %745 = vrot.lane.b32.xlu0 %v742, 124
      %v746 = vpop.permute.xlu0 %745
      %v749 = vadd.f32 %v713, %v744
      %v750 = vadd.f32 %v714, %v746
      %s751 = scalar_lea.vmem %s3, 32
      %v752 = vld [vmem:[%s751] sm:$0xff]
      %v753 = vld [vmem:[%s751 + $0x8] sm:$0xff]
      %756 = vrot.lane.b32.xlu0 %v752, 8
      %v757 = vpop.permute.xlu0 %756
      %758 = vrot.lane.b32.xlu0 %v753, 8
      %v759 = vpop.permute.xlu0 %758
      %v762 = vmul.f32 %v464, %v757
      %v763 = vmul.f32 %v465, %v759
      %766 = vrot.lane.b32.xlu0 %v762, 120
      %v767 = vpop.permute.xlu0 %766
      %768 = vrot.lane.b32.xlu0 %v763, 120
      %v769 = vpop.permute.xlu0 %768
      %v772 = vadd.f32 %v749, %v767
      %v773 = vadd.f32 %v750, %v769
      %s774 = scalar_lea.vmem %s3, 112
      %v775 = vld [vmem:[%s774] sm:$0xff]
      %v776 = vld [vmem:[%s774 + $0x8] sm:$0xff]
      %v779 = vrot.slane %v775, 7
      %v780 = vrot.slane %v776, 7
      %v781 = vsel %vm478, %v779, %v780
      %782 = vrot.lane.b32.xlu0 %v779, 8
      %v783 = vpop.permute.xlu0 %782
      %784 = vrot.lane.b32.xlu0 %v781, 8
      %v785 = vpop.permute.xlu0 %784
      %786 = vrot.lane.b32.xlu0 %v780, 8
      %v787 = vpop.permute.xlu0 %786
      %v791 = vmul.f32 %v464, %v783
      %v792 = vmul.f32 %v465, %v785
      %v793 = vmul.f32 %v466, %v787
      %v797 = vrot.slane %v791, 1
      %v798 = vrot.slane %v792, 1
      %v799 = vsel %vm491, %v797, %v798
      %v800 = vrot.slane %v793, 1
      %v801 = vsel %vm491, %v798, %v800
      %802 = vrot.lane.b32.xlu0 %v799, 120
      %v803 = vpop.permute.xlu0 %802
      %804 = vrot.lane.b32.xlu0 %v801, 120
      %v805 = vpop.permute.xlu0 %804
      %v808 = vadd.f32 %v772, %v803
      %v809 = vadd.f32 %v773, %v805
      %s810 = scalar_lea.vmem %s3, 192
      %v811 = vld [vmem:[%s810] sm:$0xff]
      %v812 = vld [vmem:[%s810 + $0x8] sm:$0xff]
      %v815 = vrot.slane %v811, 6
      %v816 = vrot.slane %v812, 6
      %v817 = vsel %vm506, %v815, %v816
      %818 = vrot.lane.b32.xlu0 %v815, 8
      %v819 = vpop.permute.xlu0 %818
      %820 = vrot.lane.b32.xlu0 %v817, 8
      %v821 = vpop.permute.xlu0 %820
      %822 = vrot.lane.b32.xlu0 %v816, 8
      %v823 = vpop.permute.xlu0 %822
      %v827 = vmul.f32 %v464, %v819
      %v828 = vmul.f32 %v465, %v821
      %v829 = vmul.f32 %v466, %v823
      %v833 = vrot.slane %v827, 2
      %v834 = vrot.slane %v828, 2
      %v835 = vsel %vm519, %v833, %v834
      %v836 = vrot.slane %v829, 2
      %v837 = vsel %vm519, %v834, %v836
      %838 = vrot.lane.b32.xlu0 %v835, 120
      %v839 = vpop.permute.xlu0 %838
      %840 = vrot.lane.b32.xlu0 %v837, 120
      %v841 = vpop.permute.xlu0 %840
      %v844 = vadd.f32 %v808, %v839
      %v845 = vadd.f32 %v809, %v841
      %s846 = scalar_lea.vmem %s3, 272
      %v847 = vld [vmem:[%s846] sm:$0xff]
      %v848 = vld [vmem:[%s846 + $0x8] sm:$0xff]
      %v851 = vrot.slane %v847, 5
      %v852 = vrot.slane %v848, 5
      %v853 = vsel %vm534, %v851, %v852
      %854 = vrot.lane.b32.xlu0 %v851, 8
      %v855 = vpop.permute.xlu0 %854
      %856 = vrot.lane.b32.xlu0 %v853, 8
      %v857 = vpop.permute.xlu0 %856
      %858 = vrot.lane.b32.xlu0 %v852, 8
      %v859 = vpop.permute.xlu0 %858
      %v863 = vmul.f32 %v464, %v855
      %v864 = vmul.f32 %v465, %v857
      %v865 = vmul.f32 %v466, %v859
      %v869 = vrot.slane %v863, 3
      %v870 = vrot.slane %v864, 3
      %v871 = vsel %vm547, %v869, %v870
      %v872 = vrot.slane %v865, 3
      %v873 = vsel %vm547, %v870, %v872
      %874 = vrot.lane.b32.xlu0 %v871, 120
      %v875 = vpop.permute.xlu0 %874
      %876 = vrot.lane.b32.xlu0 %v873, 120
      %v877 = vpop.permute.xlu0 %876
      %v880 = vadd.f32 %v844, %v875
      %v881 = vadd.f32 %v845, %v877
      %s882 = scalar_lea.vmem %s3, 352
      %v883 = vld [vmem:[%s882] sm:$0xff]
      %v884 = vld [vmem:[%s882 + $0x8] sm:$0xff]
      %v887 = vrot.slane %v883, 4
      %v888 = vrot.slane %v884, 4
      %v889 = vsel %vm562, %v887, %v888
      %890 = vrot.lane.b32.xlu0 %v887, 8
      %v891 = vpop.permute.xlu0 %890
      %892 = vrot.lane.b32.xlu0 %v889, 8
      %v893 = vpop.permute.xlu0 %892
      %894 = vrot.lane.b32.xlu0 %v888, 8
      %v895 = vpop.permute.xlu0 %894
      %v899 = vmul.f32 %v464, %v891
      %v900 = vmul.f32 %v465, %v893
      %v901 = vmul.f32 %v466, %v895
      %v905 = vrot.slane %v899, 4
      %v906 = vrot.slane %v900, 4
      %v907 = vsel %vm562, %v905, %v906
      %v908 = vrot.slane %v901, 4
      %v909 = vsel %vm562, %v906, %v908
      %910 = vrot.lane.b32.xlu0 %v907, 120
      %v911 = vpop.permute.xlu0 %910
      %912 = vrot.lane.b32.xlu0 %v909, 120
      %v913 = vpop.permute.xlu0 %912
      %v916 = vadd.f32 %v880, %v911
      %v917 = vadd.f32 %v881, %v913
      %s918 = scalar_lea.vmem %s3, 48
      %v919 = vld [vmem:[%s918] sm:$0xff]
      %v920 = vld [vmem:[%s918 + $0x8] sm:$0xff]
      %923 = vrot.lane.b32.xlu0 %v919, 12
      %v924 = vpop.permute.xlu0 %923
      %925 = vrot.lane.b32.xlu0 %v920, 12
      %v926 = vpop.permute.xlu0 %925
      %v929 = vmul.f32 %v464, %v924
      %v930 = vmul.f32 %v465, %v926
      %933 = vrot.lane.b32.xlu0 %v929, 116
      %v934 = vpop.permute.xlu0 %933
      %935 = vrot.lane.b32.xlu0 %v930, 116
      %v936 = vpop.permute.xlu0 %935
      %v939 = vadd.f32 %v916, %v934
      %v940 = vadd.f32 %v917, %v936
      %s941 = scalar_lea.vmem %s3, 128
      %v942 = vld [vmem:[%s941] sm:$0xff]
      %v943 = vld [vmem:[%s941 + $0x8] sm:$0xff]
      %v946 = vrot.slane %v942, 7
      %v947 = vrot.slane %v943, 7
      %v948 = vsel %vm478, %v946, %v947
      %949 = vrot.lane.b32.xlu0 %v946, 12
      %v950 = vpop.permute.xlu0 %949
      %951 = vrot.lane.b32.xlu0 %v948, 12
      %v952 = vpop.permute.xlu0 %951
      %953 = vrot.lane.b32.xlu0 %v947, 12
      %v954 = vpop.permute.xlu0 %953
      %v958 = vmul.f32 %v464, %v950
      %v959 = vmul.f32 %v465, %v952
      %v960 = vmul.f32 %v466, %v954
      %v964 = vrot.slane %v958, 1
      %v965 = vrot.slane %v959, 1
      %v966 = vsel %vm491, %v964, %v965
      %v967 = vrot.slane %v960, 1
      %v968 = vsel %vm491, %v965, %v967
      %969 = vrot.lane.b32.xlu0 %v966, 116
      %v970 = vpop.permute.xlu0 %969
      %971 = vrot.lane.b32.xlu0 %v968, 116
      %v972 = vpop.permute.xlu0 %971
      %v975 = vadd.f32 %v939, %v970
      %v976 = vadd.f32 %v940, %v972
      %s977 = scalar_lea.vmem %s3, 208
      %v978 = vld [vmem:[%s977] sm:$0xff]
      %v979 = vld [vmem:[%s977 + $0x8] sm:$0xff]
      %v982 = vrot.slane %v978, 6
      %v983 = vrot.slane %v979, 6
      %v984 = vsel %vm506, %v982, %v983
      %985 = vrot.lane.b32.xlu0 %v982, 12
      %v986 = vpop.permute.xlu0 %985
      %987 = vrot.lane.b32.xlu0 %v984, 12
      %v988 = vpop.permute.xlu0 %987
      %989 = vrot.lane.b32.xlu0 %v983, 12
      %v990 = vpop.permute.xlu0 %989
      %v994 = vmul.f32 %v464, %v986
      %v995 = vmul.f32 %v465, %v988
      %v996 = vmul.f32 %v466, %v990
      %v1000 = vrot.slane %v994, 2
      %v1001 = vrot.slane %v995, 2
      %v1002 = vsel %vm519, %v1000, %v1001
      %v1003 = vrot.slane %v996, 2
      %v1004 = vsel %vm519, %v1001, %v1003
      %1005 = vrot.lane.b32.xlu0 %v1002, 116
      %v1006 = vpop.permute.xlu0 %1005
      %1007 = vrot.lane.b32.xlu0 %v1004, 116
      %v1008 = vpop.permute.xlu0 %1007
      %v1011 = vadd.f32 %v975, %v1006
      %v1012 = vadd.f32 %v976, %v1008
      %s1013 = scalar_lea.vmem %s3, 288
      %v1014 = vld [vmem:[%s1013] sm:$0xff]
      %v1015 = vld [vmem:[%s1013 + $0x8] sm:$0xff]
      %v1018 = vrot.slane %v1014, 5
      %v1019 = vrot.slane %v1015, 5
      %v1020 = vsel %vm534, %v1018, %v1019
      %1021 = vrot.lane.b32.xlu0 %v1018, 12
      %v1022 = vpop.permute.xlu0 %1021
      %1023 = vrot.lane.b32.xlu0 %v1020, 12
      %v1024 = vpop.permute.xlu0 %1023
      %1025 = vrot.lane.b32.xlu0 %v1019, 12
      %v1026 = vpop.permute.xlu0 %1025
      %v1030 = vmul.f32 %v464, %v1022
      %v1031 = vmul.f32 %v465, %v1024
      %v1032 = vmul.f32 %v466, %v1026
      %v1036 = vrot.slane %v1030, 3
      %v1037 = vrot.slane %v1031, 3
      %v1038 = vsel %vm547, %v1036, %v1037
      %v1039 = vrot.slane %v1032, 3
      %v1040 = vsel %vm547, %v1037, %v1039
      %1041 = vrot.lane.b32.xlu0 %v1038, 116
      %v1042 = vpop.permute.xlu0 %1041
      %1043 = vrot.lane.b32.xlu0 %v1040, 116
      %v1044 = vpop.permute.xlu0 %1043
      %v1047 = vadd.f32 %v1011, %v1042
      %v1048 = vadd.f32 %v1012, %v1044
      %s1049 = scalar_lea.vmem %s3, 368
      %v1050 = vld [vmem:[%s1049] sm:$0xff]
      %v1051 = vld [vmem:[%s1049 + $0x8] sm:$0xff]
      %v1054 = vrot.slane %v1050, 4
      %v1055 = vrot.slane %v1051, 4
      %v1056 = vsel %vm562, %v1054, %v1055
      %1057 = vrot.lane.b32.xlu0 %v1054, 12
      %v1058 = vpop.permute.xlu0 %1057
      %1059 = vrot.lane.b32.xlu0 %v1056, 12
      %v1060 = vpop.permute.xlu0 %1059
      %1061 = vrot.lane.b32.xlu0 %v1055, 12
      %v1062 = vpop.permute.xlu0 %1061
      %v1066 = vmul.f32 %v464, %v1058
      %v1067 = vmul.f32 %v465, %v1060
      %v1068 = vmul.f32 %v466, %v1062
      %v1072 = vrot.slane %v1066, 4
      %v1073 = vrot.slane %v1067, 4
      %v1074 = vsel %vm562, %v1072, %v1073
      %v1075 = vrot.slane %v1068, 4
      %v1076 = vsel %vm562, %v1073, %v1075
      %1077 = vrot.lane.b32.xlu0 %v1074, 116
      %v1078 = vpop.permute.xlu0 %1077
      %1079 = vrot.lane.b32.xlu0 %v1076, 116
      %v1080 = vpop.permute.xlu0 %1079
      %v1083 = vadd.f32 %v1047, %v1078
      %v1084 = vadd.f32 %v1048, %v1080
      %s1085 = scalar_lea.vmem %s3, 64
      %v1086 = vld [vmem:[%s1085] sm:$0xff]
      %v1087 = vld [vmem:[%s1085 + $0x8] sm:$0xff]
      %1090 = vrot.lane.b32.xlu0 %v1086, 16
      %v1091 = vpop.permute.xlu0 %1090
      %1092 = vrot.lane.b32.xlu0 %v1087, 16
      %v1093 = vpop.permute.xlu0 %1092
      %v1096 = vmul.f32 %v464, %v1091
      %v1097 = vmul.f32 %v465, %v1093
      %1100 = vrot.lane.b32.xlu0 %v1096, 112
      %v1101 = vpop.permute.xlu0 %1100
      %1102 = vrot.lane.b32.xlu0 %v1097, 112
      %v1103 = vpop.permute.xlu0 %1102
      %v1106 = vadd.f32 %v1083, %v1101
      %v1107 = vadd.f32 %v1084, %v1103
      %s1108 = scalar_lea.vmem %s3, 144
      %v1109 = vld [vmem:[%s1108] sm:$0xff]
      %v1110 = vld [vmem:[%s1108 + $0x8] sm:$0xff]
      %v1113 = vrot.slane %v1109, 7
      %v1114 = vrot.slane %v1110, 7
      %v1115 = vsel %vm478, %v1113, %v1114
      %1116 = vrot.lane.b32.xlu0 %v1113, 16
      %v1117 = vpop.permute.xlu0 %1116
      %1118 = vrot.lane.b32.xlu0 %v1115, 16
      %v1119 = vpop.permute.xlu0 %1118
      %1120 = vrot.lane.b32.xlu0 %v1114, 16
      %v1121 = vpop.permute.xlu0 %1120
      %v1125 = vmul.f32 %v464, %v1117
      %v1126 = vmul.f32 %v465, %v1119
      %v1127 = vmul.f32 %v466, %v1121
      %v1131 = vrot.slane %v1125, 1
      %v1132 = vrot.slane %v1126, 1
      %v1133 = vsel %vm491, %v1131, %v1132
      %v1134 = vrot.slane %v1127, 1
      %v1135 = vsel %vm491, %v1132, %v1134
      %1136 = vrot.lane.b32.xlu0 %v1133, 112
      %v1137 = vpop.permute.xlu0 %1136
      %1138 = vrot.lane.b32.xlu0 %v1135, 112
      %v1139 = vpop.permute.xlu0 %1138
      %v1142 = vadd.f32 %v1106, %v1137
      %v1143 = vadd.f32 %v1107, %v1139
      %s1144 = scalar_lea.vmem %s3, 224
      %v1145 = vld [vmem:[%s1144] sm:$0xff]
      %v1146 = vld [vmem:[%s1144 + $0x8] sm:$0xff]
      %v1149 = vrot.slane %v1145, 6
      %v1150 = vrot.slane %v1146, 6
      %v1151 = vsel %vm506, %v1149, %v1150
      %1152 = vrot.lane.b32.xlu0 %v1149, 16
      %v1153 = vpop.permute.xlu0 %1152
      %1154 = vrot.lane.b32.xlu0 %v1151, 16
      %v1155 = vpop.permute.xlu0 %1154
      %1156 = vrot.lane.b32.xlu0 %v1150, 16
      %v1157 = vpop.permute.xlu0 %1156
      %v1161 = vmul.f32 %v464, %v1153
      %v1162 = vmul.f32 %v465, %v1155
      %v1163 = vmul.f32 %v466, %v1157
      %v1167 = vrot.slane %v1161, 2
      %v1168 = vrot.slane %v1162, 2
      %v1169 = vsel %vm519, %v1167, %v1168
      %v1170 = vrot.slane %v1163, 2
      %v1171 = vsel %vm519, %v1168, %v1170
      %1172 = vrot.lane.b32.xlu0 %v1169, 112
      %v1173 = vpop.permute.xlu0 %1172
      %1174 = vrot.lane.b32.xlu0 %v1171, 112
      %v1175 = vpop.permute.xlu0 %1174
      %v1178 = vadd.f32 %v1142, %v1173
      %v1179 = vadd.f32 %v1143, %v1175
      %s1180 = scalar_lea.vmem %s3, 304
      %v1181 = vld [vmem:[%s1180] sm:$0xff]
      %v1182 = vld [vmem:[%s1180 + $0x8] sm:$0xff]
      %v1185 = vrot.slane %v1181, 5
      %v1186 = vrot.slane %v1182, 5
      %v1187 = vsel %vm534, %v1185, %v1186
      %1188 = vrot.lane.b32.xlu0 %v1185, 16
      %v1189 = vpop.permute.xlu0 %1188
      %1190 = vrot.lane.b32.xlu0 %v1187, 16
      %v1191 = vpop.permute.xlu0 %1190
      %1192 = vrot.lane.b32.xlu0 %v1186, 16
      %v1193 = vpop.permute.xlu0 %1192
      %v1197 = vmul.f32 %v464, %v1189
      %v1198 = vmul.f32 %v465, %v1191
      %v1199 = vmul.f32 %v466, %v1193
      %v1203 = vrot.slane %v1197, 3
      %v1204 = vrot.slane %v1198, 3
      %v1205 = vsel %vm547, %v1203, %v1204
      %v1206 = vrot.slane %v1199, 3
      %v1207 = vsel %vm547, %v1204, %v1206
      %1208 = vrot.lane.b32.xlu0 %v1205, 112
      %v1209 = vpop.permute.xlu0 %1208
      %1210 = vrot.lane.b32.xlu0 %v1207, 112
      %v1211 = vpop.permute.xlu0 %1210
      %v1214 = vadd.f32 %v1178, %v1209
      %v1215 = vadd.f32 %v1179, %v1211
      %s1216 = scalar_lea.vmem %s3, 384
      %v1217 = vld [vmem:[%s1216] sm:$0xff]
      %v1218 = vld [vmem:[%s1216 + $0x8] sm:$0xff]
      %v1221 = vrot.slane %v1217, 4
      %v1222 = vrot.slane %v1218, 4
      %v1223 = vsel %vm562, %v1221, %v1222
      %1224 = vrot.lane.b32.xlu0 %v1221, 16
      %v1225 = vpop.permute.xlu0 %1224
      %1226 = vrot.lane.b32.xlu0 %v1223, 16
      %v1227 = vpop.permute.xlu0 %1226
      %1228 = vrot.lane.b32.xlu0 %v1222, 16
      %v1229 = vpop.permute.xlu0 %1228
      %v1233 = vmul.f32 %v464, %v1225
      %v1234 = vmul.f32 %v465, %v1227
      %v1235 = vmul.f32 %v466, %v1229
      %v1239 = vrot.slane %v1233, 4
      %v1240 = vrot.slane %v1234, 4
      %v1241 = vsel %vm562, %v1239, %v1240
      %v1242 = vrot.slane %v1235, 4
      %v1243 = vsel %vm562, %v1240, %v1242
      %1244 = vrot.lane.b32.xlu0 %v1241, 112
      %v1245 = vpop.permute.xlu0 %1244
      %1246 = vrot.lane.b32.xlu0 %v1243, 112
      %v1247 = vpop.permute.xlu0 %1246
      %v1250 = vadd.f32 %v1214, %v1245
      %v1251 = vadd.f32 %v1215, %v1247
      %v1252 = vld [vmem:[%s4] sm:$0x1]
      %v1254 = vlaneseq
      %v1255 = vshrl.u32 %v1254, 7
      %v1256 = vsub.s32 0, %v1255
      %v1257 = vrot.slane %v1252, %v1256
      %v1259 = vadd.f32 %v1250, %v1257
      %v1260 = vadd.f32 %v1251, %v1257
      %v1261 = vmin.f32 %v1259, 20.0
      %v1262 = vmin.f32 %v1260, 20.0
      %v1263 = vmul.f32 %v1261, 1.442695
      %v1264 = vpow.pop %v1263
      %v1265 = vmul.f32 %v1262, 1.442695
      %v1266 = vpow.pop %v1265
      %v1267 = vadd.f32 %v1264, 2.0
      %v1268 = vadd.f32 %v1266, 2.0
      %v1269 = vmul.f32 %v1264, %v1267
      %v1270 = vmul.f32 %v1266, %v1268
      %v1271 = vadd.f32 %v1269, 2.0
      %v1272 = vadd.f32 %v1270, 2.0
      %v1273 = vrcp.pop %v1271
      %v1274 = vmul.f32 %v1269, %v1273
      %v1275 = vrcp.pop %v1272
      %v1276 = vmul.f32 %v1270, %v1275
      %v1277 = vmul.f32 %v1259, %v1274
      %v1278 = vmul.f32 %v1260, %v1276
      %v1279 = vld [vmem:[%s5] sm:$0xff]
      %v1280 = vld [vmem:[%s5 + $0x8] sm:$0xff]
      %v1281 = vld [vmem:[%s5 + $0x10] sm:$0xff]
      %v1282 = vld [vmem:[%s5 + $0x18] sm:$0xff]
      %v1283 = vld [vmem:[%s5 + $0x20] sm:$0xff]
      %v1284 = vld [vmem:[%s5 + $0x28] sm:$0xff]
      %v1285 = vld [vmem:[%s5 + $0x30] sm:$0xff]
      %v1286 = vld [vmem:[%s5 + $0x38] sm:$0xff]
      %v1287 = vld [vmem:[%s6] sm:$0x1]
      %v1289 = vlaneseq
      %v1290 = vshrl.u32 %v1289, 7
      %v1291 = vsub.s32 0, %v1290
      %v1292 = vrot.slane %v1287, %v1291
      %vm1294 = vcmask 523264
      %v1296 = vsel %vm1294, %v1277, 0
      %v1299 = vsel %vm1294, %v1278, 0
      %1301 = vmatprep.subr.mxu0 0.0
      %1302 = vmatpush1.msra.mxu0 0.0
      %1303 = vmatprep.subr.mxu0 0.0
      %1304 = vmatpush1.msra.mxu0 0.0
      %1305 = vmatprep.subr.mxu0 0.0
      %1306 = vmatpush1.msra.mxu0 0.0
      %1307 = vmatprep.subr.mxu0 0.0
      %1308 = vmatpush1.msra.mxu0 0.0
      %1309 = vmatprep.subr.mxu0 0.0
      %1310 = vmatpush1.msra.mxu0 0.0
      %1311 = vmatprep.subr.mxu0 0.0
      %1312 = vmatpush1.msra.mxu0 0.0
      %1313 = vmatprep.subr.mxu0 0.0
      %1314 = vmatpush1.msra.mxu0 0.0
      %1315 = vmatprep.subr.mxu0 0.0
      %1316 = vmatpush1.msra.mxu0 0.0
      %1317 = vmatprep.subr.mxu0 0.0
      %1318 = vmatpush1.msra.mxu0 %v1286
      %1319 = vmatprep.subr.mxu0 0.0
      %1320 = vmatpush1.msra.mxu0 %v1285
      %1321 = vmatprep.subr.mxu0 0.0
      %1322 = vmatpush1.msra.mxu0 %v1284
      %1323 = vmatprep.subr.mxu0 0.0
      %1324 = vmatpush1.msra.mxu0 %v1283
      %1325 = vmatprep.subr.mxu0 0.0
      %1326 = vmatpush1.msra.mxu0 %v1282
      %1327 = vmatprep.subr.mxu0 0.0
      %1328 = vmatpush1.msra.mxu0 %v1281
      %1329 = vmatprep.subr.mxu0 0.0
      %1330 = vmatpush1.msra.mxu0 %v1280
      %1331 = vmatprep.subr.mxu0 0.0
      %1332 = vmatpush1.msra.mxu0 %v1279
      %1333 = vmatprep.subr.mxu0 0.0
      %1334 = vmatpush2.msra.mxu0 0.0
      %1335 = vmatprep.subr.mxu0 0.0
      %1336 = vmatpush2.msra.mxu0 0.0
      %1337 = vmatprep.subr.mxu0 0.0
      %1338 = vmatpush2.msra.mxu0 0.0
      %1339 = vmatprep.subr.mxu0 0.0
      %1340 = vmatpush2.msra.mxu0 0.0
      %1341 = vmatprep.subr.mxu0 0.0
      %1342 = vmatpush2.msra.mxu0 0.0
      %1343 = vmatprep.subr.mxu0 0.0
      %1344 = vmatpush2.msra.mxu0 0.0
      %1345 = vmatprep.subr.mxu0 0.0
      %1346 = vmatpush2.msra.mxu0 0.0
      %1347 = vmatprep.subr.mxu0 0.0
      %1348 = vmatpush2.msra.mxu0 0.0
      %1349 = vmatprep.subr.mxu0 0.0
      %1350 = vmatpush2.msra.mxu0 0.0
      %1351 = vmatprep.subr.mxu0 0.0
      %1352 = vmatpush2.msra.mxu0 0.0
      %1353 = vmatprep.subr.mxu0 0.0
      %1354 = vmatpush2.msra.mxu0 0.0
      %1355 = vmatprep.subr.mxu0 0.0
      %1356 = vmatpush2.msra.mxu0 0.0
      %1357 = vmatprep.subr.mxu0 0.0
      %1358 = vmatpush2.msra.mxu0 0.0
      %1359 = vmatprep.subr.mxu0 0.0
      %1360 = vmatpush2.msra.mxu0 0.0
      %1361 = vmatprep.subr.mxu0 0.0
      %1362 = vmatpush2.msra.mxu0 0.0
      %1363 = vmatprep.subr.mxu0 0.0
      %1364 = vmatpush2.msra.mxu0 0.0
      %1365 = vmatprep.mubr.f32.mxu0 0.0
      %1366 = vmatmul.mubr.f32.gmra.mxu0 %v1296
      %v1367 = vpop.f32.mrf.mxu0
      %v1368 = vadd.f32 %v1292, %v1367
      %v1369 = vpop.f32.mrf.mxu0
      %1370 = vmatprep.mubr.f32.mxu0 0.0
      %1371 = vmatmul.mubr.f32.gmra.mxu0 %v1299
      %v1372 = vpop.f32.mrf.mxu0
      %v1373 = vadd.f32 %v1292, %v1372
      %v1374 = vpop.f32.mrf.mxu0
      %1375 = vdwg.mxu0
      %v1376 = vmin.f32 %v1368, 20.0
      %v1377 = vmin.f32 %v1373, 20.0
      %v1378 = vmul.f32 %v1376, 1.442695
      %v1379 = vpow.pop %v1378
      %v1380 = vmul.f32 %v1377, 1.442695
      %v1381 = vpow.pop %v1380
      %v1382 = vadd.f32 %v1379, 2.0
      %v1383 = vadd.f32 %v1381, 2.0
      %v1384 = vmul.f32 %v1379, %v1382
      %v1385 = vmul.f32 %v1381, %v1383
      %v1386 = vadd.f32 %v1384, 2.0
      %v1387 = vadd.f32 %v1385, 2.0
      %v1388 = vrcp.pop %v1386
      %v1389 = vmul.f32 %v1384, %v1388
      %v1390 = vrcp.pop %v1387
      %v1391 = vmul.f32 %v1385, %v1390
      %v1392 = vmul.f32 %v1368, %v1389
      %v1393 = vmul.f32 %v1373, %v1391
      %1394 = vst [vmem:[%s300] sm:$0xff] %v1392
      %1395 = vst [vmem:[%s300 + $0x8] sm:$0xff] %v1393
      %s1396 = smul.u32 2, %s23
      %p1397 = scmp.lt.s32.totalorder %s22, 1
      %s1398 = scalar_select %p1397, %s22, 1
      %p1399 = scmp.lt.s32.totalorder %s1396, 1
      %s1400 = scalar_select %p1399, %s1396, 1
      %s1401 = smul.addr %s1398, 2
      %s1402 = sadd.s32 %s1400, %s1401
      %s1403 = smul.addr %s1402, 8
      %s1404 = scalar_lea.vmem %s7, %s1403
      // Predicated region
      $region49: #{depth_bottleneck_uni.1} parent=47 // pred_check
        %p1405 = pneg %p202
      $region50: #{depth_bottleneck_uni.1} parent=47 // pred_check_branch
        %1407 = sbr.rel (%p1405) target = $region52
      $region51: #{depth_bottleneck_uni.1} parent=47 // pred_region
        %s1408 = smul.u32 2, %s23
      $region52: #{depth_bottleneck_uni.1} parent=47 // pred_fallthru
        _
    $region48: #{depth_bottleneck_uni.1} parent=5 // pred_fallthru
      _
    %p1409 = scmp.le.s32.totalorder 2, %s13
    // Predicated region
    $region53: #{depth_bottleneck_uni.1} parent=5 // pred_check
      %p1410 = pneg %p1409
    $region54: #{depth_bottleneck_uni.1} parent=5 // pred_check_branch
      %1412 = sbr.rel (%p1410) target = $region56
    $region55: #{depth_bottleneck_uni.1} parent=5 // pred_region
      %s1413 = ssub.s32 %s13, 2
      // Predicated region
      $region57: #{depth_bottleneck_uni.1} parent=55 // pred_check
        %p1414 = pneg %p208
      $region58: #{depth_bottleneck_uni.1} parent=55 // pred_check_branch
        %1416 = sbr.rel (%p1414) target = $region60
      $region59: #{depth_bottleneck_uni.1} parent=55 // pred_region
        %s1417 = smul.u32 2, %s25
        %p1418 = scmp.lt.s32.totalorder %s24, 1
        %s1419 = scalar_select %p1418, %s24, 1
        %p1420 = scmp.lt.s32.totalorder %s1417, 1
        %s1421 = scalar_select %p1420, %s1417, 1
        %s1422 = smul.addr %s1419, 2
        %s1423 = sadd.s32 %s1421, %s1422
        %s1424 = smul.addr %s1423, 8
        %s1425 = scalar_lea.vmem %s7, %s1424
      $region60: #{depth_bottleneck_uni.1} parent=55 // pred_fallthru
        _
    $region56: #{depth_bottleneck_uni.1} parent=5 // pred_fallthru
      _
  $region6: #{depth_bottleneck_uni.1} parent=0 // loop_footer
    %s17 = sadd.s32 1, %s13
  $region7: #{depth_bottleneck_uni.1} parent=0 // loop_footer_branch
    %12 = sbr.rel target = $region3
  $region8: #{depth_bottleneck_uni.1} parent=0 // loop_exit
    _

</llo_original>
